<compile_context>
chip_gen: v7x
topology: tpu7x:2x2x1
jax: 0.10.0
libtpu: 0.0.40
codegen_flags: <defaults>
</compile_context>

<pallas_src>
import jax
import jax.numpy as jnp
from jax.experimental import pallas as pl
from jax.experimental.pallas import tpu as pltpu

# Logical layer dims of the PyTorch Net.
D_IN = 1464
LAYER_DIMS = [(1464, 256), (256, 128), (128, 64), (64, 16), (16, 6)]

# Kernel-side padded dims (lane-friendly multiples of 128).
K_PAD = 1536      # 1464 -> 1536, zero-padded (dominant matmul gets clean lanes)
OUT_PAD = 128     # 6 -> 128, zero-padded (lane-dense output, no masked stores)
TB_MAX = 512      # batch tile; safe for default scoped VMEM on v5e/v6e/v7x


def _round_up(x, m):
    return (x + m - 1) // m * m


def mlp_kernel(x_ref,
               w1_ref, b1_ref,
               w2_ref, b2_ref,
               w3_ref, b3_ref,
               w4_ref, b4_ref,
               w5_ref, b5_ref,
               o_ref):
    """One batch tile of the fused 5-layer MLP.

    x_ref : (TB, 1536) f32     zero-padded along K
    wN    : (K, N)     bf16    grid-invariant, resident in VMEM
    bN    : (1, N)     f32
    o_ref : (TB, 128)  f32     lane-dense; columns 6..127 are zero
    """
    h = x_ref[...]
    h = jnp.maximum(
        jnp.dot(h, w1_ref[...].astype(jnp.float32),
                preferred_element_type=jnp.float32) + b1_ref[...], 0.0)
    h = jnp.maximum(
        jnp.dot(h, w2_ref[...].astype(jnp.float32),
                preferred_element_type=jnp.float32) + b2_ref[...], 0.0)
    h = jnp.maximum(
        jnp.dot(h, w3_ref[...].astype(jnp.float32),
                preferred_element_type=jnp.float32) + b3_ref[...], 0.0)
    h = jnp.maximum(
        jnp.dot(h, w4_ref[...].astype(jnp.float32),
                preferred_element_type=jnp.float32) + b4_ref[...], 0.0)
    h = (jnp.dot(h, w5_ref[...].astype(jnp.float32),
                 preferred_element_type=jnp.float32) + b5_ref[...])
    o_ref[...] = h


def prepare_kernel_params(params):
    """bf16 weights, (1, N) f32 biases; zero-pad w1 K dim and w5/b5 out dim."""
    (w1, b1), (w2, b2), (w3, b3), (w4, b4), (w5, b5) = params
    w1p = jnp.zeros((K_PAD, 256), jnp.float32).at[:D_IN, :].set(w1).astype(jnp.bfloat16)
    w5p = jnp.zeros((16, OUT_PAD), jnp.float32).at[:, :6].set(w5).astype(jnp.bfloat16)
    b5p = jnp.zeros((1, OUT_PAD), jnp.float32).at[:, :6].set(b5.reshape(1, -1))
    return (w1p, b1.reshape(1, -1),
            w2.astype(jnp.bfloat16), b2.reshape(1, -1),
            w3.astype(jnp.bfloat16), b3.reshape(1, -1),
            w4.astype(jnp.bfloat16), b4.reshape(1, -1),
            w5p, b5p)


def _resident_spec(arr):
    """Full-array block that never changes with the grid index (stays in VMEM)."""
    return pl.BlockSpec(arr.shape, lambda i: (0, 0))


def net_forward(obs, params, tb_max=TB_MAX):
    """Matches Net.forward: reshape to (-1, 1464), run the fused MLP kernel."""
    x = obs.reshape((-1, D_IN)).astype(jnp.float32)
    B = x.shape[0]

    tb = min(tb_max, _round_up(B, 8))
    b_pad = _round_up(B, tb)
    n_tiles = b_pad // tb

    # Zero-pad batch to a tile multiple and K 1464 -> 1536.
    xp = jnp.zeros((b_pad, K_PAD), jnp.float32).at[:B, :D_IN].set(x)

    kp = prepare_kernel_params(params)
    w1, b1, w2, b2, w3, b3, w4, b4, w5, b5 = kp

    # Explicit per-argument BlockSpecs (no late-bound closures).
    in_specs = [
        pl.BlockSpec((tb, K_PAD), lambda i: (i, 0)),   # x tile, pipelined over batch
        _resident_spec(w1), _resident_spec(b1),
        _resident_spec(w2), _resident_spec(b2),
        _resident_spec(w3), _resident_spec(b3),
        _resident_spec(w4), _resident_spec(b4),
        _resident_spec(w5), _resident_spec(b5),
    ]
    out_spec = pl.BlockSpec((tb, OUT_PAD), lambda i: (i, 0))

    flops = 2 * b_pad * (K_PAD * 256 + 256 * 128 + 128 * 64 + 64 * 16 + 16 * OUT_PAD)
    bytes_accessed = (sum(int(a.size) * a.dtype.itemsize for a in kp)
                      + b_pad * (K_PAD + OUT_PAD) * 4)

    out = pl.pallas_call(
        mlp_kernel,
        out_shape=jax.ShapeDtypeStruct((b_pad, OUT_PAD), jnp.float32),
        grid=(n_tiles,),
        in_specs=in_specs,
        out_specs=out_spec,
        compiler_params=pltpu.CompilerParams(
            dimension_semantics=("parallel",)),
        cost_estimate=pl.CostEstimate(
            flops=flops, transcendentals=0, bytes_accessed=bytes_accessed),
    )(xp, *kp)

    return out[:B, :6]


def init_params(key):
    """Deterministic init mirroring nn.Linear defaults; weights stored (F_in, F_out)."""
    params = []
    for fan_in, fan_out in LAYER_DIMS:
        key, kw, kb = jax.random.split(key, 3)
        bound = 1.0 / jnp.sqrt(float(fan_in))
        w = jax.random.uniform(kw, (fan_in, fan_out), jnp.float32, -bound, bound)
        b = jax.random.uniform(kb, (fan_out,), jnp.float32, -bound, bound)
        params.append((w, b))
    return params


def reference_forward(obs, params):
    """Plain-JAX reference using the same bf16 weight quantization as the kernel."""
    x = obs.reshape((-1, D_IN)).astype(jnp.float32)
    for i, (w, b) in enumerate(params):
        wq = w.astype(jnp.bfloat16).astype(jnp.float32)
        x = x @ wq + b
        if i < len(params) - 1:
            x = jnp.maximum(x, 0.0)
    return x


if __name__ == "__main__":
    key = jax.random.PRNGKey(0)
    key, pkey, xkey = jax.random.split(key, 3)

    params = init_params(pkey)

    # Example observation: (2, 4, 1464) -> reshape(-1, 1464) -> (8, 1464)
    obs = jax.random.normal(xkey, (2, 4, 1464), dtype=jnp.float32)

    out = jax.block_until_ready(net_forward(obs, params))
    ref = reference_forward(obs, params)

    assert out.shape == (8, 6), out.shape
    max_err = float(jnp.max(jnp.abs(out - ref)))
    assert max_err < 1e-3, max_err

    print("KERNEL_OK")
</pallas_src>

<mosaic_0001>
module attributes {stable_mosaic.version = 11 : i64} {
  func.func @mlp_kernel(%arg0: i32, %arg1: memref<8x1536xf32, #tpu.memory_space<vmem>>, %arg2: memref<1536x256xbf16, #tpu.memory_space<vmem>>, %arg3: memref<1x256xf32, #tpu.memory_space<vmem>>, %arg4: memref<256x128xbf16, #tpu.memory_space<vmem>>, %arg5: memref<1x128xf32, #tpu.memory_space<vmem>>, %arg6: memref<128x64xbf16, #tpu.memory_space<vmem>>, %arg7: memref<1x64xf32, #tpu.memory_space<vmem>>, %arg8: memref<64x16xbf16, #tpu.memory_space<vmem>>, %arg9: memref<1x16xf32, #tpu.memory_space<vmem>>, %arg10: memref<16x128xbf16, #tpu.memory_space<vmem>>, %arg11: memref<1x128xf32, #tpu.memory_space<vmem>>, %arg12: memref<8x128xf32, #tpu.memory_space<vmem>>) attributes {dimension_semantics = [#tpu.dimension_semantics<parallel>], iteration_bounds = array<i64: 1>, scalar_prefetch = 0 : i64, scratch_operands = 0 : i64, tpu.core_type = #tpu.core_type<tc>, window_params = [{transform_indices = @transform_0, window_bounds = array<i64: 8, 1536>}, {pipeline_mode = #tpu.pipeline_mode<synchronous>, transform_indices = @transform_1, window_bounds = array<i64: 1536, 256>}, {pipeline_mode = #tpu.pipeline_mode<synchronous>, transform_indices = @transform_2, window_bounds = array<i64: 1, 256>}, {pipeline_mode = #tpu.pipeline_mode<synchronous>, transform_indices = @transform_3, window_bounds = array<i64: 256, 128>}, {pipeline_mode = #tpu.pipeline_mode<synchronous>, transform_indices = @transform_4, window_bounds = array<i64: 1, 128>}, {pipeline_mode = #tpu.pipeline_mode<synchronous>, transform_indices = @transform_5, window_bounds = array<i64: 128, 64>}, {pipeline_mode = #tpu.pipeline_mode<synchronous>, transform_indices = @transform_6, window_bounds = array<i64: 1, 64>}, {pipeline_mode = #tpu.pipeline_mode<synchronous>, transform_indices = @transform_7, window_bounds = array<i64: 64, 16>}, {pipeline_mode = #tpu.pipeline_mode<synchronous>, transform_indices = @transform_8, window_bounds = array<i64: 1, 16>}, {pipeline_mode = #tpu.pipeline_mode<synchronous>, transform_indices = @transform_9, window_bounds = array<i64: 16, 128>}, {pipeline_mode = #tpu.pipeline_mode<synchronous>, transform_indices = @transform_10, window_bounds = array<i64: 1, 128>}, {transform_indices = @transform_11, window_bounds = array<i64: 8, 128>}]} {
    %c0 = arith.constant 0 : index
    %c0_0 = arith.constant 0 : index
    %0 = vector.load %arg1[%c0, %c0_0] : memref<8x1536xf32, #tpu.memory_space<vmem>>, vector<8x1536xf32>
    %c0_1 = arith.constant 0 : index
    %c0_2 = arith.constant 0 : index
    %1 = vector.load %arg2[%c0_1, %c0_2] : memref<1536x256xbf16, #tpu.memory_space<vmem>>, vector<1536x256xbf16>
    %2 = arith.extf %1 : vector<1536x256xbf16> to vector<1536x256xf32>
    %cst = arith.constant dense<0.000000e+00> : vector<8x256xf32>
    %3 = tpu.matmul %0, %2, %cst {dimension_numbers = #tpu.dot_dimension_numbers<[1], [0], [0], [1], [0, 0, 1, 1], [], []>} : vector<8x1536xf32>, vector<1536x256xf32>, vector<8x256xf32> -> vector<8x256xf32>
    %c0_3 = arith.constant 0 : index
    %c0_4 = arith.constant 0 : index
    %4 = vector.load %arg3[%c0_3, %c0_4] : memref<1x256xf32, #tpu.memory_space<vmem>>, vector<1x256xf32>
    %5 = vector.broadcast %4 : vector<1x256xf32> to vector<8x256xf32>
    %6 = arith.addf %3, %5 : vector<8x256xf32>
    %cst_5 = arith.constant 0.000000e+00 : f32
    %7 = vector.broadcast %cst_5 : f32 to vector<8x256xf32>
    %8 = arith.maximumf %6, %7 : vector<8x256xf32>
    %c0_6 = arith.constant 0 : index
    %c0_7 = arith.constant 0 : index
    %9 = vector.load %arg4[%c0_6, %c0_7] : memref<256x128xbf16, #tpu.memory_space<vmem>>, vector<256x128xbf16>
    %10 = arith.extf %9 : vector<256x128xbf16> to vector<256x128xf32>
    %cst_8 = arith.constant dense<0.000000e+00> : vector<8x128xf32>
    %11 = tpu.matmul %8, %10, %cst_8 {dimension_numbers = #tpu.dot_dimension_numbers<[1], [0], [0], [1], [0, 0, 1, 1], [], []>} : vector<8x256xf32>, vector<256x128xf32>, vector<8x128xf32> -> vector<8x128xf32>
    %c0_9 = arith.constant 0 : index
    %c0_10 = arith.constant 0 : index
    %12 = vector.load %arg5[%c0_9, %c0_10] : memref<1x128xf32, #tpu.memory_space<vmem>>, vector<1x128xf32>
    %13 = vector.broadcast %12 : vector<1x128xf32> to vector<8x128xf32>
    %14 = arith.addf %11, %13 : vector<8x128xf32>
    %cst_11 = arith.constant 0.000000e+00 : f32
    %15 = vector.broadcast %cst_11 : f32 to vector<8x128xf32>
    %16 = arith.maximumf %14, %15 : vector<8x128xf32>
    %c0_12 = arith.constant 0 : index
    %c0_13 = arith.constant 0 : index
    %17 = vector.load %arg6[%c0_12, %c0_13] : memref<128x64xbf16, #tpu.memory_space<vmem>>, vector<128x64xbf16>
    %18 = arith.extf %17 : vector<128x64xbf16> to vector<128x64xf32>
    %cst_14 = arith.constant dense<0.000000e+00> : vector<8x64xf32>
    %19 = tpu.matmul %16, %18, %cst_14 {dimension_numbers = #tpu.dot_dimension_numbers<[1], [0], [0], [1], [0, 0, 1, 1], [], []>} : vector<8x128xf32>, vector<128x64xf32>, vector<8x64xf32> -> vector<8x64xf32>
    %c0_15 = arith.constant 0 : index
    %c0_16 = arith.constant 0 : index
    %20 = vector.load %arg7[%c0_15, %c0_16] : memref<1x64xf32, #tpu.memory_space<vmem>>, vector<1x64xf32>
    %21 = vector.broadcast %20 : vector<1x64xf32> to vector<8x64xf32>
    %22 = arith.addf %19, %21 : vector<8x64xf32>
    %cst_17 = arith.constant 0.000000e+00 : f32
    %23 = vector.broadcast %cst_17 : f32 to vector<8x64xf32>
    %24 = arith.maximumf %22, %23 : vector<8x64xf32>
    %c0_18 = arith.constant 0 : index
    %c0_19 = arith.constant 0 : index
    %25 = vector.load %arg8[%c0_18, %c0_19] : memref<64x16xbf16, #tpu.memory_space<vmem>>, vector<64x16xbf16>
    %26 = arith.extf %25 : vector<64x16xbf16> to vector<64x16xf32>
    %cst_20 = arith.constant dense<0.000000e+00> : vector<8x16xf32>
    %27 = tpu.matmul %24, %26, %cst_20 {dimension_numbers = #tpu.dot_dimension_numbers<[1], [0], [0], [1], [0, 0, 1, 1], [], []>} : vector<8x64xf32>, vector<64x16xf32>, vector<8x16xf32> -> vector<8x16xf32>
    %c0_21 = arith.constant 0 : index
    %c0_22 = arith.constant 0 : index
    %28 = vector.load %arg9[%c0_21, %c0_22] : memref<1x16xf32, #tpu.memory_space<vmem>>, vector<1x16xf32>
    %29 = vector.broadcast %28 : vector<1x16xf32> to vector<8x16xf32>
    %30 = arith.addf %27, %29 : vector<8x16xf32>
    %cst_23 = arith.constant 0.000000e+00 : f32
    %31 = vector.broadcast %cst_23 : f32 to vector<8x16xf32>
    %32 = arith.maximumf %30, %31 : vector<8x16xf32>
    %c0_24 = arith.constant 0 : index
    %c0_25 = arith.constant 0 : index
    %33 = vector.load %arg10[%c0_24, %c0_25] : memref<16x128xbf16, #tpu.memory_space<vmem>>, vector<16x128xbf16>
    %34 = arith.extf %33 : vector<16x128xbf16> to vector<16x128xf32>
    %cst_26 = arith.constant dense<0.000000e+00> : vector<8x128xf32>
    %35 = tpu.matmul %32, %34, %cst_26 {dimension_numbers = #tpu.dot_dimension_numbers<[1], [0], [0], [1], [0, 0, 1, 1], [], []>} : vector<8x16xf32>, vector<16x128xf32>, vector<8x128xf32> -> vector<8x128xf32>
    %c0_27 = arith.constant 0 : index
    %c0_28 = arith.constant 0 : index
    %36 = vector.load %arg11[%c0_27, %c0_28] : memref<1x128xf32, #tpu.memory_space<vmem>>, vector<1x128xf32>
    %37 = vector.broadcast %36 : vector<1x128xf32> to vector<8x128xf32>
    %38 = arith.addf %35, %37 : vector<8x128xf32>
    %c0_29 = arith.constant 0 : index
    %c0_30 = arith.constant 0 : index
    %39 = vector.load %arg12[%c0_29, %c0_30] : memref<8x128xf32, #tpu.memory_space<vmem>>, vector<8x128xf32>
    tpu.vector_store %arg12[%c0_29, %c0_30], %38 {strides = array<i32>} : memref<8x128xf32, #tpu.memory_space<vmem>>, vector<8x128xf32>,
    return
  }
  func.func @transform_0(%arg0: i32) -> (i32, i32) {
    %c0_i32 = arith.constant 0 : i32
    %c0_i32_0 = arith.constant 0 : i32
    return %arg0, %c0_i32 : i32, i32
  }
  func.func @transform_1(%arg0: i32) -> (i32, i32) {
    %c0_i32 = arith.constant 0 : i32
    %c0_i32_0 = arith.constant 0 : i32
    %c0_i32_1 = arith.constant 0 : i32
    return %c0_i32, %c0_i32_0 : i32, i32
  }
  func.func @transform_2(%arg0: i32) -> (i32, i32) {
    %c0_i32 = arith.constant 0 : i32
    %c0_i32_0 = arith.constant 0 : i32
    %c0_i32_1 = arith.constant 0 : i32
    return %c0_i32, %c0_i32_0 : i32, i32
  }
  func.func @transform_3(%arg0: i32) -> (i32, i32) {
    %c0_i32 = arith.constant 0 : i32
    %c0_i32_0 = arith.constant 0 : i32
    %c0_i32_1 = arith.constant 0 : i32
    return %c0_i32, %c0_i32_0 : i32, i32
  }
  func.func @transform_4(%arg0: i32) -> (i32, i32) {
    %c0_i32 = arith.constant 0 : i32
    %c0_i32_0 = arith.constant 0 : i32
    %c0_i32_1 = arith.constant 0 : i32
    return %c0_i32, %c0_i32_0 : i32, i32
  }
  func.func @transform_5(%arg0: i32) -> (i32, i32) {
    %c0_i32 = arith.constant 0 : i32
    %c0_i32_0 = arith.constant 0 : i32
    %c0_i32_1 = arith.constant 0 : i32
    return %c0_i32, %c0_i32_0 : i32, i32
  }
  func.func @transform_6(%arg0: i32) -> (i32, i32) {
    %c0_i32 = arith.constant 0 : i32
    %c0_i32_0 = arith.constant 0 : i32
    %c0_i32_1 = arith.constant 0 : i32
    return %c0_i32, %c0_i32_0 : i32, i32
  }
  func.func @transform_7(%arg0: i32) -> (i32, i32) {
    %c0_i32 = arith.constant 0 : i32
    %c0_i32_0 = arith.constant 0 : i32
    %c0_i32_1 = arith.constant 0 : i32
    return %c0_i32, %c0_i32_0 : i32, i32
  }
  func.func @transform_8(%arg0: i32) -> (i32, i32) {
    %c0_i32 = arith.constant 0 : i32
    %c0_i32_0 = arith.constant 0 : i32
    %c0_i32_1 = arith.constant 0 : i32
    return %c0_i32, %c0_i32_0 : i32, i32
  }
  func.func @transform_9(%arg0: i32) -> (i32, i32) {
    %c0_i32 = arith.constant 0 : i32
    %c0_i32_0 = arith.constant 0 : i32
    %c0_i32_1 = arith.constant 0 : i32
    return %c0_i32, %c0_i32_0 : i32, i32
  }
  func.func @transform_10(%arg0: i32) -> (i32, i32) {
    %c0_i32 = arith.constant 0 : i32
    %c0_i32_0 = arith.constant 0 : i32
    %c0_i32_1 = arith.constant 0 : i32
    return %c0_i32, %c0_i32_0 : i32, i32
  }
  func.func @transform_11(%arg0: i32) -> (i32, i32) {
    %c0_i32 = arith.constant 0 : i32
    %c0_i32_0 = arith.constant 0 : i32
    return %arg0, %c0_i32 : i32, i32
  }
}

</mosaic_0001>

<llo_original>
// kernel: tpu_custom_call.1
$region0: #{tpu_custom_call.1}
  #allocation0 [shape = 'u32[]', space=smem, size = 0x4, offset = 0x4, fixed_abs, tag = 'smem constant byte address 0x4 - core index']
  #allocation1 [shape = 'u32[144,128]{1,0:T(1,128)}', space=vmem, size = 0x12000, scoped, tag = 'internal scratch']
  %s0 = inlined_call_operand.hbm [shape: f32[8,1536], index: 0, kind: input, shape index: {}]
  %s1 = inlined_call_operand.hbm [shape: bf16[1536,256], index: 1, kind: input, shape index: {}]
  %s2 = inlined_call_operand.vmem [shape: f32[1,256], index: 2, kind: input, shape index: {}]
  %s3 = inlined_call_operand.vmem [shape: bf16[256,128], index: 3, kind: input, shape index: {}]
  %s4 = inlined_call_operand.vmem [shape: f32[1,128], index: 4, kind: input, shape index: {}]
  %s5 = inlined_call_operand.vmem [shape: bf16[128,64], index: 5, kind: input, shape index: {}]
  %s6 = inlined_call_operand.vmem [shape: f32[1,64], index: 6, kind: input, shape index: {}]
  %s7 = inlined_call_operand.vmem [shape: bf16[64,16], index: 7, kind: input, shape index: {}]
  %s8 = inlined_call_operand.vmem [shape: f32[1,16], index: 8, kind: input, shape index: {}]
  %s9 = inlined_call_operand.vmem [shape: bf16[16,128], index: 9, kind: input, shape index: {}]
  %s10 = inlined_call_operand.vmem [shape: f32[1,128], index: 10, kind: input, shape index: {}]
  %s11 = inlined_call_operand.hbm [shape: f32[8,128], index: 11, kind: output, shape index: {}]
  %s12 = sld [smem:[#allocation0]]
  $region62: #{tpu_custom_call.1} parent=0
    _
  %s14 = ssub.s32 1, %s12
  %s15 = scalar_select 0, %s14, %s12
  $region1: #{tpu_custom_call.1} parent=0
    #allocation2 [shape = 'u8[49152]{0}', space=vmem, size = 0xc000, scoped, tag = 'input window, operand 0, single buffered']
    #allocation3 [shape = 's32[1]{0}', space=sflag, size = 0x4, scoped, tag = 'scoped memory for tpu_custom_call.1']
    #allocation4 [shape = 's32[1]{0}', space=sflag, size = 0x4, scoped, tag = 'scoped memory for tpu_custom_call.1']
    #allocation5 [shape = 'u8[786432]{0}', space=vmem, size = 0xc0000, scoped, tag = 'input window, operand 1, single buffered']
    #allocation6 [shape = 's32[1]{0}', space=sflag, size = 0x4, scoped, tag = 'scoped memory for tpu_custom_call.1']
    #allocation7 [shape = 'u8[4096]{0}', space=vmem, size = 0x1000, scoped, tag = 'output window, operand 0, single buffered']
    %16 = vsyncpa [#allocation3], 0
    %17 = vsyncpa [#allocation6], 0
    %18 = vsyncpa [#allocation4], 0
    // Predicated region
    $region2: #{tpu_custom_call.1} parent=1 // pred_check
      _
    $region3: #{tpu_custom_call.1} parent=1 // pred_check_branch
      %20 = sbr.rel (0) target = $region5
    $region4: #{tpu_custom_call.1} parent=1 // pred_region
      %s22 = ssub.s32 1536, 1536
      %23 = vsyncadd [#allocation3], %s22
      %s25 = sshll.u32 [#allocation2], 4
      %s26 = int_to_ptr.vmem [resolvable:$true] %s25
      %28 = dma.hbm_to_vmem [thread:$0]  %s0, 1536, %s26, [#allocation3]
    $region5: #{tpu_custom_call.1} parent=1 // pred_fallthru
      _
    // Predicated region
    $region6: #{tpu_custom_call.1} parent=1 // pred_check
      _
    $region7: #{tpu_custom_call.1} parent=1 // pred_check_branch
      %30 = sbr.rel (0) target = $region9
    $region8: #{tpu_custom_call.1} parent=1 // pred_region
      %s32 = ssub.s32 24576, 24576
      %33 = vsyncadd [#allocation6], %s32
      %s34 = sshll.u32 [#allocation5], 4
      %s35 = int_to_ptr.vmem [resolvable:$true] %s34
      %40 = dma.hbm_to_vmem [thread:$0]  %s1, 24576, %s35, [#allocation6], 128, 128, 8
    $region9: #{tpu_custom_call.1} parent=1 // pred_fallthru
      _
    // Predicated region
    $region10: #{tpu_custom_call.1} parent=1 // pred_check
      _
    $region11: #{tpu_custom_call.1} parent=1 // pred_check_branch
      %42 = sbr.rel (0) target = $region13
    $region12: #{tpu_custom_call.1} parent=1 // pred_region
      _
    $region13: #{tpu_custom_call.1} parent=1 // pred_fallthru
      _
    // Predicated region
    $region14: #{tpu_custom_call.1} parent=1 // pred_check
      _
    $region15: #{tpu_custom_call.1} parent=1 // pred_check_branch
      %44 = sbr.rel (0) target = $region17
    $region16: #{tpu_custom_call.1} parent=1 // pred_region
      _
    $region17: #{tpu_custom_call.1} parent=1 // pred_fallthru
      _
    // Predicated region
    $region18: #{tpu_custom_call.1} parent=1 // pred_check
      _
    $region19: #{tpu_custom_call.1} parent=1 // pred_check_branch
      %46 = sbr.rel (0) target = $region21
    $region20: #{tpu_custom_call.1} parent=1 // pred_region
      _
    $region21: #{tpu_custom_call.1} parent=1 // pred_fallthru
      _
    // Predicated region
    $region22: #{tpu_custom_call.1} parent=1 // pred_check
      _
    $region23: #{tpu_custom_call.1} parent=1 // pred_check_branch
      %48 = sbr.rel (0) target = $region25
    $region24: #{tpu_custom_call.1} parent=1 // pred_region
      _
    $region25: #{tpu_custom_call.1} parent=1 // pred_fallthru
      _
    // Predicated region
    $region26: #{tpu_custom_call.1} parent=1 // pred_check
      _
    $region27: #{tpu_custom_call.1} parent=1 // pred_check_branch
      %50 = sbr.rel (0) target = $region29
    $region28: #{tpu_custom_call.1} parent=1 // pred_region
      _
    $region29: #{tpu_custom_call.1} parent=1 // pred_fallthru
      _
    // Predicated region
    $region30: #{tpu_custom_call.1} parent=1 // pred_check
      _
    $region31: #{tpu_custom_call.1} parent=1 // pred_check_branch
      %52 = sbr.rel (0) target = $region33
    $region32: #{tpu_custom_call.1} parent=1 // pred_region
      _
    $region33: #{tpu_custom_call.1} parent=1 // pred_fallthru
      _
    // Predicated region
    $region34: #{tpu_custom_call.1} parent=1 // pred_check
      _
    $region35: #{tpu_custom_call.1} parent=1 // pred_check_branch
      %54 = sbr.rel (0) target = $region37
    $region36: #{tpu_custom_call.1} parent=1 // pred_region
      _
    $region37: #{tpu_custom_call.1} parent=1 // pred_fallthru
      _
    // Predicated region
    $region38: #{tpu_custom_call.1} parent=1 // pred_check
      _
    $region39: #{tpu_custom_call.1} parent=1 // pred_check_branch
      %56 = sbr.rel (0) target = $region41
    $region40: #{tpu_custom_call.1} parent=1 // pred_region
      _
    $region41: #{tpu_custom_call.1} parent=1 // pred_fallthru
      _
    // Predicated region
    $region42: #{tpu_custom_call.1} parent=1 // pred_check
      _
    $region43: #{tpu_custom_call.1} parent=1 // pred_check_branch
      %58 = sbr.rel (0) target = $region45
    $region44: #{tpu_custom_call.1} parent=1 // pred_region
      _
    $region45: #{tpu_custom_call.1} parent=1 // pred_fallthru
      _
    // Predicated region
    $region46: #{tpu_custom_call.1} parent=1 // pred_check
      _
    $region47: #{tpu_custom_call.1} parent=1 // pred_check_branch
      %60 = sbr.rel (0) target = $region49
    $region48: #{tpu_custom_call.1} parent=1 // pred_region
      %61 = dma.done [#allocation3], 1536
    $region49: #{tpu_custom_call.1} parent=1 // pred_fallthru
      _
    // Predicated region
    $region50: #{tpu_custom_call.1} parent=1 // pred_check
      _
    $region51: #{tpu_custom_call.1} parent=1 // pred_check_branch
      %63 = sbr.rel (0) target = $region53
    $region52: #{tpu_custom_call.1} parent=1 // pred_region
      %64 = dma.done [#allocation6], 24576
    $region53: #{tpu_custom_call.1} parent=1 // pred_fallthru
      _
    %v65 = vld [vmem:[#allocation2] sm:$0xff]
    %v66 = vld [vmem:[#allocation2 + $0x8] sm:$0xff]
    %v67 = vld [vmem:[#allocation2 + $0x10] sm:$0xff]
    %v68 = vld [vmem:[#allocation2 + $0x18] sm:$0xff]
    %v69 = vld [vmem:[#allocation2 + $0x20] sm:$0xff]
    %v70 = vld [vmem:[#allocation2 + $0x28] sm:$0xff]
    %v71 = vld [vmem:[#allocation2 + $0x30] sm:$0xff]
    %v72 = vld [vmem:[#allocation2 + $0x38] sm:$0xff]
    %v73 = vld [vmem:[#allocation2 + $0x40] sm:$0xff]
    %v74 = vld [vmem:[#allocation2 + $0x48] sm:$0xff]
    %v75 = vld [vmem:[#allocation2 + $0x50] sm:$0xff]
    %v76 = vld [vmem:[#allocation2 + $0x58] sm:$0xff]
    %v77 = vld [vmem:[#allocation5] sm:$0xff]
    %v78 = vld [vmem:[#allocation5 + $0x8] sm:$0xff]
    %v79 = vld [vmem:[#allocation5 + $0x10] sm:$0xff]
    %v80 = vld [vmem:[#allocation5 + $0x18] sm:$0xff]
    %v81 = vld [vmem:[#allocation5 + $0x20] sm:$0xff]
    %v82 = vld [vmem:[#allocation5 + $0x28] sm:$0xff]
    %v83 = vld [vmem:[#allocation5 + $0x30] sm:$0xff]
    %v84 = vld [vmem:[#allocation5 + $0x38] sm:$0xff]
    %v85 = vld [vmem:[#allocation5 + $0x40] sm:$0xff]
    %v86 = vld [vmem:[#allocation5 + $0x48] sm:$0xff]
    %v87 = vld [vmem:[#allocation5 + $0x50] sm:$0xff]
    %v88 = vld [vmem:[#allocation5 + $0x58] sm:$0xff]
    %v89 = vld [vmem:[#allocation5 + $0x60] sm:$0xff]
    %v90 = vld [vmem:[#allocation5 + $0x68] sm:$0xff]
    %v91 = vld [vmem:[#allocation5 + $0x70] sm:$0xff]
    %v92 = vld [vmem:[#allocation5 + $0x78] sm:$0xff]
    %v93 = vld [vmem:[#allocation5 + $0x80] sm:$0xff]
    %v94 = vld [vmem:[#allocation5 + $0x88] sm:$0xff]
    %v95 = vld [vmem:[#allocation5 + $0x90] sm:$0xff]
    %v96 = vld [vmem:[#allocation5 + $0x98] sm:$0xff]
    %v97 = vld [vmem:[#allocation5 + $0xa0] sm:$0xff]
    %v98 = vld [vmem:[#allocation5 + $0xa8] sm:$0xff]
    %v99 = vld [vmem:[#allocation5 + $0xb0] sm:$0xff]
    %v100 = vld [vmem:[#allocation5 + $0xb8] sm:$0xff]
    %v101 = vld [vmem:[#allocation5 + $0xc0] sm:$0xff]
    %v102 = vld [vmem:[#allocation5 + $0xc8] sm:$0xff]
    %v103 = vld [vmem:[#allocation5 + $0xd0] sm:$0xff]
    %v104 = vld [vmem:[#allocation5 + $0xd8] sm:$0xff]
    %v105 = vld [vmem:[#allocation5 + $0xe0] sm:$0xff]
    %v106 = vld [vmem:[#allocation5 + $0xe8] sm:$0xff]
    %v107 = vld [vmem:[#allocation5 + $0xf0] sm:$0xff]
    %v108 = vld [vmem:[#allocation5 + $0xf8] sm:$0xff]
    %v109 = vld [vmem:[#allocation5 + $0x100] sm:$0xff]
    %v110 = vld [vmem:[#allocation5 + $0x108] sm:$0xff]
    %v111 = vld [vmem:[#allocation5 + $0x110] sm:$0xff]
    %v112 = vld [vmem:[#allocation5 + $0x118] sm:$0xff]
    %v113 = vld [vmem:[#allocation5 + $0x120] sm:$0xff]
    %v114 = vld [vmem:[#allocation5 + $0x128] sm:$0xff]
    %v115 = vld [vmem:[#allocation5 + $0x130] sm:$0xff]
    %v116 = vld [vmem:[#allocation5 + $0x138] sm:$0xff]
    %v117 = vld [vmem:[#allocation5 + $0x140] sm:$0xff]
    %v118 = vld [vmem:[#allocation5 + $0x148] sm:$0xff]
    %v119 = vld [vmem:[#allocation5 + $0x150] sm:$0xff]
    %v120 = vld [vmem:[#allocation5 + $0x158] sm:$0xff]
    %v121 = vld [vmem:[#allocation5 + $0x160] sm:$0xff]
    %v122 = vld [vmem:[#allocation5 + $0x168] sm:$0xff]
    %v123 = vld [vmem:[#allocation5 + $0x170] sm:$0xff]
    %v124 = vld [vmem:[#allocation5 + $0x178] sm:$0xff]
    %v125 = vld [vmem:[#allocation5 + $0x180] sm:$0xff]
    %v126 = vld [vmem:[#allocation5 + $0x188] sm:$0xff]
    %v127 = vld [vmem:[#allocation5 + $0x190] sm:$0xff]
    %v128 = vld [vmem:[#allocation5 + $0x198] sm:$0xff]
    %v129 = vld [vmem:[#allocation5 + $0x1a0] sm:$0xff]
    %v130 = vld [vmem:[#allocation5 + $0x1a8] sm:$0xff]
    %v131 = vld [vmem:[#allocation5 + $0x1b0] sm:$0xff]
    %v132 = vld [vmem:[#allocation5 + $0x1b8] sm:$0xff]
    %v133 = vld [vmem:[#allocation5 + $0x1c0] sm:$0xff]
    %v134 = vld [vmem:[#allocation5 + $0x1c8] sm:$0xff]
    %v135 = vld [vmem:[#allocation5 + $0x1d0] sm:$0xff]
    %v136 = vld [vmem:[#allocation5 + $0x1d8] sm:$0xff]
    %v137 = vld [vmem:[#allocation5 + $0x1e0] sm:$0xff]
    %v138 = vld [vmem:[#allocation5 + $0x1e8] sm:$0xff]
    %v139 = vld [vmem:[#allocation5 + $0x1f0] sm:$0xff]
    %v140 = vld [vmem:[#allocation5 + $0x1f8] sm:$0xff]
    %v141 = vld [vmem:[#allocation5 + $0x200] sm:$0xff]
    %v142 = vld [vmem:[#allocation5 + $0x208] sm:$0xff]
    %v143 = vld [vmem:[#allocation5 + $0x210] sm:$0xff]
    %v144 = vld [vmem:[#allocation5 + $0x218] sm:$0xff]
    %v145 = vld [vmem:[#allocation5 + $0x220] sm:$0xff]
    %v146 = vld [vmem:[#allocation5 + $0x228] sm:$0xff]
    %v147 = vld [vmem:[#allocation5 + $0x230] sm:$0xff]
    %v148 = vld [vmem:[#allocation5 + $0x238] sm:$0xff]
    %v149 = vld [vmem:[#allocation5 + $0x240] sm:$0xff]
    %v150 = vld [vmem:[#allocation5 + $0x248] sm:$0xff]
    %v151 = vld [vmem:[#allocation5 + $0x250] sm:$0xff]
    %v152 = vld [vmem:[#allocation5 + $0x258] sm:$0xff]
    %v153 = vld [vmem:[#allocation5 + $0x260] sm:$0xff]
    %v154 = vld [vmem:[#allocation5 + $0x268] sm:$0xff]
    %v155 = vld [vmem:[#allocation5 + $0x270] sm:$0xff]
    %v156 = vld [vmem:[#allocation5 + $0x278] sm:$0xff]
    %v157 = vld [vmem:[#allocation5 + $0x280] sm:$0xff]
    %v158 = vld [vmem:[#allocation5 + $0x288] sm:$0xff]
    %v159 = vld [vmem:[#allocation5 + $0x290] sm:$0xff]
    %v160 = vld [vmem:[#allocation5 + $0x298] sm:$0xff]
    %v161 = vld [vmem:[#allocation5 + $0x2a0] sm:$0xff]
    %v162 = vld [vmem:[#allocation5 + $0x2a8] sm:$0xff]
    %v163 = vld [vmem:[#allocation5 + $0x2b0] sm:$0xff]
    %v164 = vld [vmem:[#allocation5 + $0x2b8] sm:$0xff]
    %v165 = vld [vmem:[#allocation5 + $0x2c0] sm:$0xff]
    %v166 = vld [vmem:[#allocation5 + $0x2c8] sm:$0xff]
    %v167 = vld [vmem:[#allocation5 + $0x2d0] sm:$0xff]
    %v168 = vld [vmem:[#allocation5 + $0x2d8] sm:$0xff]
    %v169 = vld [vmem:[#allocation5 + $0x2e0] sm:$0xff]
    %v170 = vld [vmem:[#allocation5 + $0x2e8] sm:$0xff]
    %v171 = vld [vmem:[#allocation5 + $0x2f0] sm:$0xff]
    %v172 = vld [vmem:[#allocation5 + $0x2f8] sm:$0xff]
    %v173 = vld [vmem:[#allocation5 + $0x300] sm:$0xff]
    %v174 = vld [vmem:[#allocation5 + $0x308] sm:$0xff]
    %v175 = vld [vmem:[#allocation5 + $0x310] sm:$0xff]
    %v176 = vld [vmem:[#allocation5 + $0x318] sm:$0xff]
    %v177 = vld [vmem:[#allocation5 + $0x320] sm:$0xff]
    %v178 = vld [vmem:[#allocation5 + $0x328] sm:$0xff]
    %v179 = vld [vmem:[#allocation5 + $0x330] sm:$0xff]
    %v180 = vld [vmem:[#allocation5 + $0x338] sm:$0xff]
    %v181 = vld [vmem:[#allocation5 + $0x340] sm:$0xff]
    %v182 = vld [vmem:[#allocation5 + $0x348] sm:$0xff]
    %v183 = vld [vmem:[#allocation5 + $0x350] sm:$0xff]
    %v184 = vld [vmem:[#allocation5 + $0x358] sm:$0xff]
    %v185 = vld [vmem:[#allocation5 + $0x360] sm:$0xff]
    %v186 = vld [vmem:[#allocation5 + $0x368] sm:$0xff]
    %v187 = vld [vmem:[#allocation5 + $0x370] sm:$0xff]
    %v188 = vld [vmem:[#allocation5 + $0x378] sm:$0xff]
    %v189 = vld [vmem:[#allocation5 + $0x380] sm:$0xff]
    %v190 = vld [vmem:[#allocation5 + $0x388] sm:$0xff]
    %v191 = vld [vmem:[#allocation5 + $0x390] sm:$0xff]
    %v192 = vld [vmem:[#allocation5 + $0x398] sm:$0xff]
    %v193 = vld [vmem:[#allocation5 + $0x3a0] sm:$0xff]
    %v194 = vld [vmem:[#allocation5 + $0x3a8] sm:$0xff]
    %v195 = vld [vmem:[#allocation5 + $0x3b0] sm:$0xff]
    %v196 = vld [vmem:[#allocation5 + $0x3b8] sm:$0xff]
    %v197 = vld [vmem:[#allocation5 + $0x3c0] sm:$0xff]
    %v198 = vld [vmem:[#allocation5 + $0x3c8] sm:$0xff]
    %v199 = vld [vmem:[#allocation5 + $0x3d0] sm:$0xff]
    %v200 = vld [vmem:[#allocation5 + $0x3d8] sm:$0xff]
    %v201 = vld [vmem:[#allocation5 + $0x3e0] sm:$0xff]
    %v202 = vld [vmem:[#allocation5 + $0x3e8] sm:$0xff]
    %v203 = vld [vmem:[#allocation5 + $0x3f0] sm:$0xff]
    %v204 = vld [vmem:[#allocation5 + $0x3f8] sm:$0xff]
    %v205 = vld [vmem:[#allocation5 + $0x400] sm:$0xff]
    %v206 = vld [vmem:[#allocation5 + $0x408] sm:$0xff]
    %v207 = vld [vmem:[#allocation5 + $0x410] sm:$0xff]
    %v208 = vld [vmem:[#allocation5 + $0x418] sm:$0xff]
    %v209 = vld [vmem:[#allocation5 + $0x420] sm:$0xff]
    %v210 = vld [vmem:[#allocation5 + $0x428] sm:$0xff]
    %v211 = vld [vmem:[#allocation5 + $0x430] sm:$0xff]
    %v212 = vld [vmem:[#allocation5 + $0x438] sm:$0xff]
    %v213 = vld [vmem:[#allocation5 + $0x440] sm:$0xff]
    %v214 = vld [vmem:[#allocation5 + $0x448] sm:$0xff]
    %v215 = vld [vmem:[#allocation5 + $0x450] sm:$0xff]
    %v216 = vld [vmem:[#allocation5 + $0x458] sm:$0xff]
    %v217 = vld [vmem:[#allocation5 + $0x460] sm:$0xff]
    %v218 = vld [vmem:[#allocation5 + $0x468] sm:$0xff]
    %v219 = vld [vmem:[#allocation5 + $0x470] sm:$0xff]
    %v220 = vld [vmem:[#allocation5 + $0x478] sm:$0xff]
    %v221 = vld [vmem:[#allocation5 + $0x480] sm:$0xff]
    %v222 = vld [vmem:[#allocation5 + $0x488] sm:$0xff]
    %v223 = vld [vmem:[#allocation5 + $0x490] sm:$0xff]
    %v224 = vld [vmem:[#allocation5 + $0x498] sm:$0xff]
    %v225 = vld [vmem:[#allocation5 + $0x4a0] sm:$0xff]
    %v226 = vld [vmem:[#allocation5 + $0x4a8] sm:$0xff]
    %v227 = vld [vmem:[#allocation5 + $0x4b0] sm:$0xff]
    %v228 = vld [vmem:[#allocation5 + $0x4b8] sm:$0xff]
    %v229 = vld [vmem:[#allocation5 + $0x4c0] sm:$0xff]
    %v230 = vld [vmem:[#allocation5 + $0x4c8] sm:$0xff]
    %v231 = vld [vmem:[#allocation5 + $0x4d0] sm:$0xff]
    %v232 = vld [vmem:[#allocation5 + $0x4d8] sm:$0xff]
    %v233 = vld [vmem:[#allocation5 + $0x4e0] sm:$0xff]
    %v234 = vld [vmem:[#allocation5 + $0x4e8] sm:$0xff]
    %v235 = vld [vmem:[#allocation5 + $0x4f0] sm:$0xff]
    %v236 = vld [vmem:[#allocation5 + $0x4f8] sm:$0xff]
    %v237 = vld [vmem:[#allocation5 + $0x500] sm:$0xff]
    %v238 = vld [vmem:[#allocation5 + $0x508] sm:$0xff]
    %v239 = vld [vmem:[#allocation5 + $0x510] sm:$0xff]
    %v240 = vld [vmem:[#allocation5 + $0x518] sm:$0xff]
    %v241 = vld [vmem:[#allocation5 + $0x520] sm:$0xff]
    %v242 = vld [vmem:[#allocation5 + $0x528] sm:$0xff]
    %v243 = vld [vmem:[#allocation5 + $0x530] sm:$0xff]
    %v244 = vld [vmem:[#allocation5 + $0x538] sm:$0xff]
    %v245 = vld [vmem:[#allocation5 + $0x540] sm:$0xff]
    %v246 = vld [vmem:[#allocation5 + $0x548] sm:$0xff]
    %v247 = vld [vmem:[#allocation5 + $0x550] sm:$0xff]
    %v248 = vld [vmem:[#allocation5 + $0x558] sm:$0xff]
    %v249 = vld [vmem:[#allocation5 + $0x560] sm:$0xff]
    %v250 = vld [vmem:[#allocation5 + $0x568] sm:$0xff]
    %v251 = vld [vmem:[#allocation5 + $0x570] sm:$0xff]
    %v252 = vld [vmem:[#allocation5 + $0x578] sm:$0xff]
    %v253 = vld [vmem:[#allocation5 + $0x580] sm:$0xff]
    %v254 = vld [vmem:[#allocation5 + $0x588] sm:$0xff]
    %v255 = vld [vmem:[#allocation5 + $0x590] sm:$0xff]
    %v256 = vld [vmem:[#allocation5 + $0x598] sm:$0xff]
    %v257 = vld [vmem:[#allocation5 + $0x5a0] sm:$0xff]
    %v258 = vld [vmem:[#allocation5 + $0x5a8] sm:$0xff]
    %v259 = vld [vmem:[#allocation5 + $0x5b0] sm:$0xff]
    %v260 = vld [vmem:[#allocation5 + $0x5b8] sm:$0xff]
    %v261 = vld [vmem:[#allocation5 + $0x5c0] sm:$0xff]
    %v262 = vld [vmem:[#allocation5 + $0x5c8] sm:$0xff]
    %v263 = vld [vmem:[#allocation5 + $0x5d0] sm:$0xff]
    %v264 = vld [vmem:[#allocation5 + $0x5d8] sm:$0xff]
    %v265 = vld [vmem:[#allocation5 + $0x5e0] sm:$0xff]
    %v266 = vld [vmem:[#allocation5 + $0x5e8] sm:$0xff]
    %v267 = vld [vmem:[#allocation5 + $0x5f0] sm:$0xff]
    %v268 = vld [vmem:[#allocation5 + $0x5f8] sm:$0xff]
    %v269 = vunpack.c.l.bf16 %v77
    %v270 = vunpack.c.h.bf16 %v77
    %v271 = vunpack.c.l.bf16 %v78
    %v272 = vunpack.c.h.bf16 %v78
    %v273 = vunpack.c.l.bf16 %v79
    %v274 = vunpack.c.h.bf16 %v79
    %v275 = vunpack.c.l.bf16 %v80
    %v276 = vunpack.c.h.bf16 %v80
    %v277 = vunpack.c.l.bf16 %v81
    %v278 = vunpack.c.h.bf16 %v81
    %v279 = vunpack.c.l.bf16 %v82
    %v280 = vunpack.c.h.bf16 %v82
    %v281 = vunpack.c.l.bf16 %v83
    %v282 = vunpack.c.h.bf16 %v83
    %v283 = vunpack.c.l.bf16 %v84
    %v284 = vunpack.c.h.bf16 %v84
    %v285 = vunpack.c.l.bf16 %v85
    %v286 = vunpack.c.h.bf16 %v85
    %v287 = vunpack.c.l.bf16 %v86
    %v288 = vunpack.c.h.bf16 %v86
    %v289 = vunpack.c.l.bf16 %v87
    %v290 = vunpack.c.h.bf16 %v87
    %v291 = vunpack.c.l.bf16 %v88
    %v292 = vunpack.c.h.bf16 %v88
    %v293 = vunpack.c.l.bf16 %v89
    %v294 = vunpack.c.h.bf16 %v89
    %v295 = vunpack.c.l.bf16 %v90
    %v296 = vunpack.c.h.bf16 %v90
    %v297 = vunpack.c.l.bf16 %v91
    %v298 = vunpack.c.h.bf16 %v91
    %v299 = vunpack.c.l.bf16 %v92
    %v300 = vunpack.c.h.bf16 %v92
    %v301 = vunpack.c.l.bf16 %v93
    %v302 = vunpack.c.h.bf16 %v93
    %v303 = vunpack.c.l.bf16 %v94
    %v304 = vunpack.c.h.bf16 %v94
    %v305 = vunpack.c.l.bf16 %v95
    %v306 = vunpack.c.h.bf16 %v95
    %v307 = vunpack.c.l.bf16 %v96
    %v308 = vunpack.c.h.bf16 %v96
    %v309 = vunpack.c.l.bf16 %v97
    %v310 = vunpack.c.h.bf16 %v97
    %v311 = vunpack.c.l.bf16 %v98
    %v312 = vunpack.c.h.bf16 %v98
    %v313 = vunpack.c.l.bf16 %v99
    %v314 = vunpack.c.h.bf16 %v99
    %v315 = vunpack.c.l.bf16 %v100
    %v316 = vunpack.c.h.bf16 %v100
    %v317 = vunpack.c.l.bf16 %v101
    %v318 = vunpack.c.h.bf16 %v101
    %v319 = vunpack.c.l.bf16 %v102
    %v320 = vunpack.c.h.bf16 %v102
    %v321 = vunpack.c.l.bf16 %v103
    %v322 = vunpack.c.h.bf16 %v103
    %v323 = vunpack.c.l.bf16 %v104
    %v324 = vunpack.c.h.bf16 %v104
    %v325 = vunpack.c.l.bf16 %v105
    %v326 = vunpack.c.h.bf16 %v105
    %v327 = vunpack.c.l.bf16 %v106
    %v328 = vunpack.c.h.bf16 %v106
    %v329 = vunpack.c.l.bf16 %v107
    %v330 = vunpack.c.h.bf16 %v107
    %v331 = vunpack.c.l.bf16 %v108
    %v332 = vunpack.c.h.bf16 %v108
    %v333 = vunpack.c.l.bf16 %v109
    %v334 = vunpack.c.h.bf16 %v109
    %v335 = vunpack.c.l.bf16 %v110
    %v336 = vunpack.c.h.bf16 %v110
    %v337 = vunpack.c.l.bf16 %v111
    %v338 = vunpack.c.h.bf16 %v111
    %v339 = vunpack.c.l.bf16 %v112
    %v340 = vunpack.c.h.bf16 %v112
    %v341 = vunpack.c.l.bf16 %v113
    %v342 = vunpack.c.h.bf16 %v113
    %v343 = vunpack.c.l.bf16 %v114
    %v344 = vunpack.c.h.bf16 %v114
    %v345 = vunpack.c.l.bf16 %v115
    %v346 = vunpack.c.h.bf16 %v115
    %v347 = vunpack.c.l.bf16 %v116
    %v348 = vunpack.c.h.bf16 %v116
    %v349 = vunpack.c.l.bf16 %v117
    %v350 = vunpack.c.h.bf16 %v117
    %v351 = vunpack.c.l.bf16 %v118
    %v352 = vunpack.c.h.bf16 %v118
    %v353 = vunpack.c.l.bf16 %v119
    %v354 = vunpack.c.h.bf16 %v119
    %v355 = vunpack.c.l.bf16 %v120
    %v356 = vunpack.c.h.bf16 %v120
    %v357 = vunpack.c.l.bf16 %v121
    %v358 = vunpack.c.h.bf16 %v121
    %v359 = vunpack.c.l.bf16 %v122
    %v360 = vunpack.c.h.bf16 %v122
    %v361 = vunpack.c.l.bf16 %v123
    %v362 = vunpack.c.h.bf16 %v123
    %v363 = vunpack.c.l.bf16 %v124
    %v364 = vunpack.c.h.bf16 %v124
    %v365 = vunpack.c.l.bf16 %v125
    %v366 = vunpack.c.h.bf16 %v125
    %v367 = vunpack.c.l.bf16 %v126
    %v368 = vunpack.c.h.bf16 %v126
    %v369 = vunpack.c.l.bf16 %v127
    %v370 = vunpack.c.h.bf16 %v127
    %v371 = vunpack.c.l.bf16 %v128
    %v372 = vunpack.c.h.bf16 %v128
    %v373 = vunpack.c.l.bf16 %v129
    %v374 = vunpack.c.h.bf16 %v129
    %v375 = vunpack.c.l.bf16 %v130
    %v376 = vunpack.c.h.bf16 %v130
    %v377 = vunpack.c.l.bf16 %v131
    %v378 = vunpack.c.h.bf16 %v131
    %v379 = vunpack.c.l.bf16 %v132
    %v380 = vunpack.c.h.bf16 %v132
    %v381 = vunpack.c.l.bf16 %v133
    %v382 = vunpack.c.h.bf16 %v133
    %v383 = vunpack.c.l.bf16 %v134
    %v384 = vunpack.c.h.bf16 %v134
    %v385 = vunpack.c.l.bf16 %v135
    %v386 = vunpack.c.h.bf16 %v135
    %v387 = vunpack.c.l.bf16 %v136
    %v388 = vunpack.c.h.bf16 %v136
    %v389 = vunpack.c.l.bf16 %v137
    %v390 = vunpack.c.h.bf16 %v137
    %v391 = vunpack.c.l.bf16 %v138
    %v392 = vunpack.c.h.bf16 %v138
    %v393 = vunpack.c.l.bf16 %v139
    %v394 = vunpack.c.h.bf16 %v139
    %v395 = vunpack.c.l.bf16 %v140
    %v396 = vunpack.c.h.bf16 %v140
    %v397 = vunpack.c.l.bf16 %v141
    %v398 = vunpack.c.h.bf16 %v141
    %v399 = vunpack.c.l.bf16 %v142
    %v400 = vunpack.c.h.bf16 %v142
    %v401 = vunpack.c.l.bf16 %v143
    %v402 = vunpack.c.h.bf16 %v143
    %v403 = vunpack.c.l.bf16 %v144
    %v404 = vunpack.c.h.bf16 %v144
    %v405 = vunpack.c.l.bf16 %v145
    %v406 = vunpack.c.h.bf16 %v145
    %v407 = vunpack.c.l.bf16 %v146
    %v408 = vunpack.c.h.bf16 %v146
    %v409 = vunpack.c.l.bf16 %v147
    %v410 = vunpack.c.h.bf16 %v147
    %v411 = vunpack.c.l.bf16 %v148
    %v412 = vunpack.c.h.bf16 %v148
    %v413 = vunpack.c.l.bf16 %v149
    %v414 = vunpack.c.h.bf16 %v149
    %v415 = vunpack.c.l.bf16 %v150
    %v416 = vunpack.c.h.bf16 %v150
    %v417 = vunpack.c.l.bf16 %v151
    %v418 = vunpack.c.h.bf16 %v151
    %v419 = vunpack.c.l.bf16 %v152
    %v420 = vunpack.c.h.bf16 %v152
    %v421 = vunpack.c.l.bf16 %v153
    %v422 = vunpack.c.h.bf16 %v153
    %v423 = vunpack.c.l.bf16 %v154
    %v424 = vunpack.c.h.bf16 %v154
    %v425 = vunpack.c.l.bf16 %v155
    %v426 = vunpack.c.h.bf16 %v155
    %v427 = vunpack.c.l.bf16 %v156
    %v428 = vunpack.c.h.bf16 %v156
    %v429 = vunpack.c.l.bf16 %v157
    %v430 = vunpack.c.h.bf16 %v157
    %v431 = vunpack.c.l.bf16 %v158
    %v432 = vunpack.c.h.bf16 %v158
    %v433 = vunpack.c.l.bf16 %v159
    %v434 = vunpack.c.h.bf16 %v159
    %v435 = vunpack.c.l.bf16 %v160
    %v436 = vunpack.c.h.bf16 %v160
    %v437 = vunpack.c.l.bf16 %v161
    %v438 = vunpack.c.h.bf16 %v161
    %v439 = vunpack.c.l.bf16 %v162
    %v440 = vunpack.c.h.bf16 %v162
    %v441 = vunpack.c.l.bf16 %v163
    %v442 = vunpack.c.h.bf16 %v163
    %v443 = vunpack.c.l.bf16 %v164
    %v444 = vunpack.c.h.bf16 %v164
    %v445 = vunpack.c.l.bf16 %v165
    %v446 = vunpack.c.h.bf16 %v165
    %v447 = vunpack.c.l.bf16 %v166
    %v448 = vunpack.c.h.bf16 %v166
    %v449 = vunpack.c.l.bf16 %v167
    %v450 = vunpack.c.h.bf16 %v167
    %v451 = vunpack.c.l.bf16 %v168
    %v452 = vunpack.c.h.bf16 %v168
    %v453 = vunpack.c.l.bf16 %v169
    %v454 = vunpack.c.h.bf16 %v169
    %v455 = vunpack.c.l.bf16 %v170
    %v456 = vunpack.c.h.bf16 %v170
    %v457 = vunpack.c.l.bf16 %v171
    %v458 = vunpack.c.h.bf16 %v171
    %v459 = vunpack.c.l.bf16 %v172
    %v460 = vunpack.c.h.bf16 %v172
    %v461 = vunpack.c.l.bf16 %v173
    %v462 = vunpack.c.h.bf16 %v173
    %v463 = vunpack.c.l.bf16 %v174
    %v464 = vunpack.c.h.bf16 %v174
    %v465 = vunpack.c.l.bf16 %v175
    %v466 = vunpack.c.h.bf16 %v175
    %v467 = vunpack.c.l.bf16 %v176
    %v468 = vunpack.c.h.bf16 %v176
    %v469 = vunpack.c.l.bf16 %v177
    %v470 = vunpack.c.h.bf16 %v177
    %v471 = vunpack.c.l.bf16 %v178
    %v472 = vunpack.c.h.bf16 %v178
    %v473 = vunpack.c.l.bf16 %v179
    %v474 = vunpack.c.h.bf16 %v179
    %v475 = vunpack.c.l.bf16 %v180
    %v476 = vunpack.c.h.bf16 %v180
    %v477 = vunpack.c.l.bf16 %v181
    %v478 = vunpack.c.h.bf16 %v181
    %v479 = vunpack.c.l.bf16 %v182
    %v480 = vunpack.c.h.bf16 %v182
    %v481 = vunpack.c.l.bf16 %v183
    %v482 = vunpack.c.h.bf16 %v183
    %v483 = vunpack.c.l.bf16 %v184
    %v484 = vunpack.c.h.bf16 %v184
    %v485 = vunpack.c.l.bf16 %v185
    %v486 = vunpack.c.h.bf16 %v185
    %v487 = vunpack.c.l.bf16 %v186
    %v488 = vunpack.c.h.bf16 %v186
    %v489 = vunpack.c.l.bf16 %v187
    %v490 = vunpack.c.h.bf16 %v187
    %v491 = vunpack.c.l.bf16 %v188
    %v492 = vunpack.c.h.bf16 %v188
    %v493 = vunpack.c.l.bf16 %v189
    %v494 = vunpack.c.h.bf16 %v189
    %v495 = vunpack.c.l.bf16 %v190
    %v496 = vunpack.c.h.bf16 %v190
    %v497 = vunpack.c.l.bf16 %v191
    %v498 = vunpack.c.h.bf16 %v191
    %v499 = vunpack.c.l.bf16 %v192
    %v500 = vunpack.c.h.bf16 %v192
    %v501 = vunpack.c.l.bf16 %v193
    %v502 = vunpack.c.h.bf16 %v193
    %v503 = vunpack.c.l.bf16 %v194
    %v504 = vunpack.c.h.bf16 %v194
    %v505 = vunpack.c.l.bf16 %v195
    %v506 = vunpack.c.h.bf16 %v195
    %v507 = vunpack.c.l.bf16 %v196
    %v508 = vunpack.c.h.bf16 %v196
    %v509 = vunpack.c.l.bf16 %v197
    %v510 = vunpack.c.h.bf16 %v197
    %v511 = vunpack.c.l.bf16 %v198
    %v512 = vunpack.c.h.bf16 %v198
    %v513 = vunpack.c.l.bf16 %v199
    %v514 = vunpack.c.h.bf16 %v199
    %v515 = vunpack.c.l.bf16 %v200
    %v516 = vunpack.c.h.bf16 %v200
    %v517 = vunpack.c.l.bf16 %v201
    %v518 = vunpack.c.h.bf16 %v201
    %v519 = vunpack.c.l.bf16 %v202
    %v520 = vunpack.c.h.bf16 %v202
    %v521 = vunpack.c.l.bf16 %v203
    %v522 = vunpack.c.h.bf16 %v203
    %v523 = vunpack.c.l.bf16 %v204
    %v524 = vunpack.c.h.bf16 %v204
    %v525 = vunpack.c.l.bf16 %v205
    %v526 = vunpack.c.h.bf16 %v205
    %v527 = vunpack.c.l.bf16 %v206
    %v528 = vunpack.c.h.bf16 %v206
    %v529 = vunpack.c.l.bf16 %v207
    %v530 = vunpack.c.h.bf16 %v207
    %v531 = vunpack.c.l.bf16 %v208
    %v532 = vunpack.c.h.bf16 %v208
    %v533 = vunpack.c.l.bf16 %v209
    %v534 = vunpack.c.h.bf16 %v209
    %v535 = vunpack.c.l.bf16 %v210
    %v536 = vunpack.c.h.bf16 %v210
    %v537 = vunpack.c.l.bf16 %v211
    %v538 = vunpack.c.h.bf16 %v211
    %v539 = vunpack.c.l.bf16 %v212
    %v540 = vunpack.c.h.bf16 %v212
    %v541 = vunpack.c.l.bf16 %v213
    %v542 = vunpack.c.h.bf16 %v213
    %v543 = vunpack.c.l.bf16 %v214
    %v544 = vunpack.c.h.bf16 %v214
    %v545 = vunpack.c.l.bf16 %v215
    %v546 = vunpack.c.h.bf16 %v215
    %v547 = vunpack.c.l.bf16 %v216
    %v548 = vunpack.c.h.bf16 %v216
    %v549 = vunpack.c.l.bf16 %v217
    %v550 = vunpack.c.h.bf16 %v217
    %v551 = vunpack.c.l.bf16 %v218
    %v552 = vunpack.c.h.bf16 %v218
    %v553 = vunpack.c.l.bf16 %v219
    %v554 = vunpack.c.h.bf16 %v219
    %v555 = vunpack.c.l.bf16 %v220
    %v556 = vunpack.c.h.bf16 %v220
    %v557 = vunpack.c.l.bf16 %v221
    %v558 = vunpack.c.h.bf16 %v221
    %v559 = vunpack.c.l.bf16 %v222
    %v560 = vunpack.c.h.bf16 %v222
    %v561 = vunpack.c.l.bf16 %v223
    %v562 = vunpack.c.h.bf16 %v223
    %v563 = vunpack.c.l.bf16 %v224
    %v564 = vunpack.c.h.bf16 %v224
    %v565 = vunpack.c.l.bf16 %v225
    %v566 = vunpack.c.h.bf16 %v225
    %v567 = vunpack.c.l.bf16 %v226
    %v568 = vunpack.c.h.bf16 %v226
    %v569 = vunpack.c.l.bf16 %v227
    %v570 = vunpack.c.h.bf16 %v227
    %v571 = vunpack.c.l.bf16 %v228
    %v572 = vunpack.c.h.bf16 %v228
    %v573 = vunpack.c.l.bf16 %v229
    %v574 = vunpack.c.h.bf16 %v229
    %v575 = vunpack.c.l.bf16 %v230
    %v576 = vunpack.c.h.bf16 %v230
    %v577 = vunpack.c.l.bf16 %v231
    %v578 = vunpack.c.h.bf16 %v231
    %v579 = vunpack.c.l.bf16 %v232
    %v580 = vunpack.c.h.bf16 %v232
    %v581 = vunpack.c.l.bf16 %v233
    %v582 = vunpack.c.h.bf16 %v233
    %v583 = vunpack.c.l.bf16 %v234
    %v584 = vunpack.c.h.bf16 %v234
    %v585 = vunpack.c.l.bf16 %v235
    %v586 = vunpack.c.h.bf16 %v235
    %v587 = vunpack.c.l.bf16 %v236
    %v588 = vunpack.c.h.bf16 %v236
    %v589 = vunpack.c.l.bf16 %v237
    %v590 = vunpack.c.h.bf16 %v237
    %v591 = vunpack.c.l.bf16 %v238
    %v592 = vunpack.c.h.bf16 %v238
    %v593 = vunpack.c.l.bf16 %v239
    %v594 = vunpack.c.h.bf16 %v239
    %v595 = vunpack.c.l.bf16 %v240
    %v596 = vunpack.c.h.bf16 %v240
    %v597 = vunpack.c.l.bf16 %v241
    %v598 = vunpack.c.h.bf16 %v241
    %v599 = vunpack.c.l.bf16 %v242
    %v600 = vunpack.c.h.bf16 %v242
    %v601 = vunpack.c.l.bf16 %v243
    %v602 = vunpack.c.h.bf16 %v243
    %v603 = vunpack.c.l.bf16 %v244
    %v604 = vunpack.c.h.bf16 %v244
    %v605 = vunpack.c.l.bf16 %v245
    %v606 = vunpack.c.h.bf16 %v245
    %v607 = vunpack.c.l.bf16 %v246
    %v608 = vunpack.c.h.bf16 %v246
    %v609 = vunpack.c.l.bf16 %v247
    %v610 = vunpack.c.h.bf16 %v247
    %v611 = vunpack.c.l.bf16 %v248
    %v612 = vunpack.c.h.bf16 %v248
    %v613 = vunpack.c.l.bf16 %v249
    %v614 = vunpack.c.h.bf16 %v249
    %v615 = vunpack.c.l.bf16 %v250
    %v616 = vunpack.c.h.bf16 %v250
    %v617 = vunpack.c.l.bf16 %v251
    %v618 = vunpack.c.h.bf16 %v251
    %v619 = vunpack.c.l.bf16 %v252
    %v620 = vunpack.c.h.bf16 %v252
    %v621 = vunpack.c.l.bf16 %v253
    %v622 = vunpack.c.h.bf16 %v253
    %v623 = vunpack.c.l.bf16 %v254
    %v624 = vunpack.c.h.bf16 %v254
    %v625 = vunpack.c.l.bf16 %v255
    %v626 = vunpack.c.h.bf16 %v255
    %v627 = vunpack.c.l.bf16 %v256
    %v628 = vunpack.c.h.bf16 %v256
    %v629 = vunpack.c.l.bf16 %v257
    %v630 = vunpack.c.h.bf16 %v257
    %v631 = vunpack.c.l.bf16 %v258
    %v632 = vunpack.c.h.bf16 %v258
    %v633 = vunpack.c.l.bf16 %v259
    %v634 = vunpack.c.h.bf16 %v259
    %v635 = vunpack.c.l.bf16 %v260
    %v636 = vunpack.c.h.bf16 %v260
    %v637 = vunpack.c.l.bf16 %v261
    %v638 = vunpack.c.h.bf16 %v261
    %v639 = vunpack.c.l.bf16 %v262
    %v640 = vunpack.c.h.bf16 %v262
    %v641 = vunpack.c.l.bf16 %v263
    %v642 = vunpack.c.h.bf16 %v263
    %v643 = vunpack.c.l.bf16 %v264
    %v644 = vunpack.c.h.bf16 %v264
    %v645 = vunpack.c.l.bf16 %v265
    %v646 = vunpack.c.h.bf16 %v265
    %v647 = vunpack.c.l.bf16 %v266
    %v648 = vunpack.c.h.bf16 %v266
    %v649 = vunpack.c.l.bf16 %v267
    %v650 = vunpack.c.h.bf16 %v267
    %v651 = vunpack.c.l.bf16 %v268
    %v652 = vunpack.c.h.bf16 %v268
    %v653 = vld [vmem:[%s2] sm:$0x3]
    %v655 = vlaneseq
    %v656 = vshrl.u32 %v655, 7
    %v657 = vsub.s32 0, %v656
    %v658 = vrot.slane %v653, %v657
    %v659 = vlaneseq
    %v660 = vshrl.u32 %v659, 7
    %v661 = vsub.s32 1, %v660
    %v662 = vrot.slane %v653, %v661
    %665 = vmatprep.subr.mxu0 %v270
    %666 = vmatpush1.msra.mxu0 %v269
    %667 = vmatprep.subr.mxu0 %v272
    %668 = vmatpush1.msra.mxu0 %v271
    %669 = vmatprep.subr.mxu0 %v274
    %670 = vmatpush1.msra.mxu0 %v273
    %671 = vmatprep.subr.mxu0 %v276
    %672 = vmatpush1.msra.mxu0 %v275
    %673 = vmatprep.subr.mxu0 %v278
    %674 = vmatpush1.msra.mxu0 %v277
    %675 = vmatprep.subr.mxu0 %v280
    %676 = vmatpush1.msra.mxu0 %v279
    %677 = vmatprep.subr.mxu0 %v282
    %678 = vmatpush1.msra.mxu0 %v281
    %679 = vmatprep.subr.mxu0 %v284
    %680 = vmatpush1.msra.mxu0 %v283
    %681 = vmatprep.subr.mxu0 %v286
    %682 = vmatpush1.msra.mxu0 %v285
    %683 = vmatprep.subr.mxu0 %v288
    %684 = vmatpush1.msra.mxu0 %v287
    %685 = vmatprep.subr.mxu0 %v290
    %686 = vmatpush1.msra.mxu0 %v289
    %687 = vmatprep.subr.mxu0 %v292
    %688 = vmatpush1.msra.mxu0 %v291
    %689 = vmatprep.subr.mxu0 %v294
    %690 = vmatpush1.msra.mxu0 %v293
    %691 = vmatprep.subr.mxu0 %v296
    %692 = vmatpush1.msra.mxu0 %v295
    %693 = vmatprep.subr.mxu0 %v298
    %694 = vmatpush1.msra.mxu0 %v297
    %695 = vmatprep.subr.mxu0 %v300
    %696 = vmatpush1.msra.mxu0 %v299
    %697 = vmatprep.subr.mxu0 %v302
    %698 = vmatpush1.msra.mxu0 %v301
    %699 = vmatprep.subr.mxu0 %v304
    %700 = vmatpush1.msra.mxu0 %v303
    %701 = vmatprep.subr.mxu0 %v306
    %702 = vmatpush1.msra.mxu0 %v305
    %703 = vmatprep.subr.mxu0 %v308
    %704 = vmatpush1.msra.mxu0 %v307
    %705 = vmatprep.subr.mxu0 %v310
    %706 = vmatpush1.msra.mxu0 %v309
    %707 = vmatprep.subr.mxu0 %v312
    %708 = vmatpush1.msra.mxu0 %v311
    %709 = vmatprep.subr.mxu0 %v314
    %710 = vmatpush1.msra.mxu0 %v313
    %711 = vmatprep.subr.mxu0 %v316
    %712 = vmatpush1.msra.mxu0 %v315
    %713 = vmatprep.subr.mxu0 %v318
    %714 = vmatpush1.msra.mxu0 %v317
    %715 = vmatprep.subr.mxu0 %v320
    %716 = vmatpush1.msra.mxu0 %v319
    %717 = vmatprep.subr.mxu0 %v322
    %718 = vmatpush1.msra.mxu0 %v321
    %719 = vmatprep.subr.mxu0 %v324
    %720 = vmatpush1.msra.mxu0 %v323
    %721 = vmatprep.subr.mxu0 %v326
    %722 = vmatpush1.msra.mxu0 %v325
    %723 = vmatprep.subr.mxu0 %v328
    %724 = vmatpush1.msra.mxu0 %v327
    %725 = vmatprep.subr.mxu0 %v330
    %726 = vmatpush1.msra.mxu0 %v329
    %727 = vmatprep.subr.mxu0 %v332
    %728 = vmatpush1.msra.mxu0 %v331
    %729 = vmatprep.mubr.f32.mxu0 %v66
    %730 = vmatmul.mubr.f32.gmra.mrb[0].mxu0 %v65
    %v731 = vpop.f32.mrb[0].mxu0
    %v732 = vadd.f32 %v658, %v731
    %v733 = vpop.f32.mrb[0].mxu0
    %v734 = vadd.f32 %v662, %v733
    %735 = vdwg.mxu0
    %736 = vmatprep.subr.mxu0 %v334
    %737 = vmatpush1.msra.mxu0 %v333
    %738 = vmatprep.subr.mxu0 %v336
    %739 = vmatpush1.msra.mxu0 %v335
    %740 = vmatprep.subr.mxu0 %v338
    %741 = vmatpush1.msra.mxu0 %v337
    %742 = vmatprep.subr.mxu0 %v340
    %743 = vmatpush1.msra.mxu0 %v339
    %744 = vmatprep.subr.mxu0 %v342
    %745 = vmatpush1.msra.mxu0 %v341
    %746 = vmatprep.subr.mxu0 %v344
    %747 = vmatpush1.msra.mxu0 %v343
    %748 = vmatprep.subr.mxu0 %v346
    %749 = vmatpush1.msra.mxu0 %v345
    %750 = vmatprep.subr.mxu0 %v348
    %751 = vmatpush1.msra.mxu0 %v347
    %752 = vmatprep.subr.mxu0 %v350
    %753 = vmatpush1.msra.mxu0 %v349
    %754 = vmatprep.subr.mxu0 %v352
    %755 = vmatpush1.msra.mxu0 %v351
    %756 = vmatprep.subr.mxu0 %v354
    %757 = vmatpush1.msra.mxu0 %v353
    %758 = vmatprep.subr.mxu0 %v356
    %759 = vmatpush1.msra.mxu0 %v355
    %760 = vmatprep.subr.mxu0 %v358
    %761 = vmatpush1.msra.mxu0 %v357
    %762 = vmatprep.subr.mxu0 %v360
    %763 = vmatpush1.msra.mxu0 %v359
    %764 = vmatprep.subr.mxu0 %v362
    %765 = vmatpush1.msra.mxu0 %v361
    %766 = vmatprep.subr.mxu0 %v364
    %767 = vmatpush1.msra.mxu0 %v363
    %768 = vmatprep.subr.mxu0 %v366
    %769 = vmatpush1.msra.mxu0 %v365
    %770 = vmatprep.subr.mxu0 %v368
    %771 = vmatpush1.msra.mxu0 %v367
    %772 = vmatprep.subr.mxu0 %v370
    %773 = vmatpush1.msra.mxu0 %v369
    %774 = vmatprep.subr.mxu0 %v372
    %775 = vmatpush1.msra.mxu0 %v371
    %776 = vmatprep.subr.mxu0 %v374
    %777 = vmatpush1.msra.mxu0 %v373
    %778 = vmatprep.subr.mxu0 %v376
    %779 = vmatpush1.msra.mxu0 %v375
    %780 = vmatprep.subr.mxu0 %v378
    %781 = vmatpush1.msra.mxu0 %v377
    %782 = vmatprep.subr.mxu0 %v380
    %783 = vmatpush1.msra.mxu0 %v379
    %784 = vmatprep.subr.mxu0 %v382
    %785 = vmatpush1.msra.mxu0 %v381
    %786 = vmatprep.subr.mxu0 %v384
    %787 = vmatpush1.msra.mxu0 %v383
    %788 = vmatprep.subr.mxu0 %v386
    %789 = vmatpush1.msra.mxu0 %v385
    %790 = vmatprep.subr.mxu0 %v388
    %791 = vmatpush1.msra.mxu0 %v387
    %792 = vmatprep.subr.mxu0 %v390
    %793 = vmatpush1.msra.mxu0 %v389
    %794 = vmatprep.subr.mxu0 %v392
    %795 = vmatpush1.msra.mxu0 %v391
    %796 = vmatprep.subr.mxu0 %v394
    %797 = vmatpush1.msra.mxu0 %v393
    %798 = vmatprep.subr.mxu0 %v396
    %799 = vmatpush1.msra.mxu0 %v395
    %800 = vmatprep.mubr.f32.mxu0 %v68
    %801 = vmatmul.mubr.f32.gmra.mrb[0].mxu0 %v67
    %v802 = vpop.f32.mrb[0].mxu0
    %v803 = vadd.f32 %v732, %v802
    %v804 = vpop.f32.mrb[0].mxu0
    %v805 = vadd.f32 %v734, %v804
    %806 = vdwg.mxu0
    %807 = vmatprep.subr.mxu0 %v398
    %808 = vmatpush1.msra.mxu0 %v397
    %809 = vmatprep.subr.mxu0 %v400
    %810 = vmatpush1.msra.mxu0 %v399
    %811 = vmatprep.subr.mxu0 %v402
    %812 = vmatpush1.msra.mxu0 %v401
    %813 = vmatprep.subr.mxu0 %v404
    %814 = vmatpush1.msra.mxu0 %v403
    %815 = vmatprep.subr.mxu0 %v406
    %816 = vmatpush1.msra.mxu0 %v405
    %817 = vmatprep.subr.mxu0 %v408
    %818 = vmatpush1.msra.mxu0 %v407
    %819 = vmatprep.subr.mxu0 %v410
    %820 = vmatpush1.msra.mxu0 %v409
    %821 = vmatprep.subr.mxu0 %v412
    %822 = vmatpush1.msra.mxu0 %v411
    %823 = vmatprep.subr.mxu0 %v414
    %824 = vmatpush1.msra.mxu0 %v413
    %825 = vmatprep.subr.mxu0 %v416
    %826 = vmatpush1.msra.mxu0 %v415
    %827 = vmatprep.subr.mxu0 %v418
    %828 = vmatpush1.msra.mxu0 %v417
    %829 = vmatprep.subr.mxu0 %v420
    %830 = vmatpush1.msra.mxu0 %v419
    %831 = vmatprep.subr.mxu0 %v422
    %832 = vmatpush1.msra.mxu0 %v421
    %833 = vmatprep.subr.mxu0 %v424
    %834 = vmatpush1.msra.mxu0 %v423
    %835 = vmatprep.subr.mxu0 %v426
    %836 = vmatpush1.msra.mxu0 %v425
    %837 = vmatprep.subr.mxu0 %v428
    %838 = vmatpush1.msra.mxu0 %v427
    %839 = vmatprep.subr.mxu0 %v430
    %840 = vmatpush1.msra.mxu0 %v429
    %841 = vmatprep.subr.mxu0 %v432
    %842 = vmatpush1.msra.mxu0 %v431
    %843 = vmatprep.subr.mxu0 %v434
    %844 = vmatpush1.msra.mxu0 %v433
    %845 = vmatprep.subr.mxu0 %v436
    %846 = vmatpush1.msra.mxu0 %v435
    %847 = vmatprep.subr.mxu0 %v438
    %848 = vmatpush1.msra.mxu0 %v437
    %849 = vmatprep.subr.mxu0 %v440
    %850 = vmatpush1.msra.mxu0 %v439
    %851 = vmatprep.subr.mxu0 %v442
    %852 = vmatpush1.msra.mxu0 %v441
    %853 = vmatprep.subr.mxu0 %v444
    %854 = vmatpush1.msra.mxu0 %v443
    %855 = vmatprep.subr.mxu0 %v446
    %856 = vmatpush1.msra.mxu0 %v445
    %857 = vmatprep.subr.mxu0 %v448
    %858 = vmatpush1.msra.mxu0 %v447
    %859 = vmatprep.subr.mxu0 %v450
    %860 = vmatpush1.msra.mxu0 %v449
    %861 = vmatprep.subr.mxu0 %v452
    %862 = vmatpush1.msra.mxu0 %v451
    %863 = vmatprep.subr.mxu0 %v454
    %864 = vmatpush1.msra.mxu0 %v453
    %865 = vmatprep.subr.mxu0 %v456
    %866 = vmatpush1.msra.mxu0 %v455
    %867 = vmatprep.subr.mxu0 %v458
    %868 = vmatpush1.msra.mxu0 %v457
    %869 = vmatprep.subr.mxu0 %v460
    %870 = vmatpush1.msra.mxu0 %v459
    %871 = vmatprep.mubr.f32.mxu0 %v70
    %872 = vmatmul.mubr.f32.gmra.mrb[0].mxu0 %v69
    %v873 = vpop.f32.mrb[0].mxu0
    %v874 = vadd.f32 %v803, %v873
    %v875 = vpop.f32.mrb[0].mxu0
    %v876 = vadd.f32 %v805, %v875
    %877 = vdwg.mxu0
    %878 = vmatprep.subr.mxu0 %v462
    %879 = vmatpush1.msra.mxu0 %v461
    %880 = vmatprep.subr.mxu0 %v464
    %881 = vmatpush1.msra.mxu0 %v463
    %882 = vmatprep.subr.mxu0 %v466
    %883 = vmatpush1.msra.mxu0 %v465
    %884 = vmatprep.subr.mxu0 %v468
    %885 = vmatpush1.msra.mxu0 %v467
    %886 = vmatprep.subr.mxu0 %v470
    %887 = vmatpush1.msra.mxu0 %v469
    %888 = vmatprep.subr.mxu0 %v472
    %889 = vmatpush1.msra.mxu0 %v471
    %890 = vmatprep.subr.mxu0 %v474
    %891 = vmatpush1.msra.mxu0 %v473
    %892 = vmatprep.subr.mxu0 %v476
    %893 = vmatpush1.msra.mxu0 %v475
    %894 = vmatprep.subr.mxu0 %v478
    %895 = vmatpush1.msra.mxu0 %v477
    %896 = vmatprep.subr.mxu0 %v480
    %897 = vmatpush1.msra.mxu0 %v479
    %898 = vmatprep.subr.mxu0 %v482
    %899 = vmatpush1.msra.mxu0 %v481
    %900 = vmatprep.subr.mxu0 %v484
    %901 = vmatpush1.msra.mxu0 %v483
    %902 = vmatprep.subr.mxu0 %v486
    %903 = vmatpush1.msra.mxu0 %v485
    %904 = vmatprep.subr.mxu0 %v488
    %905 = vmatpush1.msra.mxu0 %v487
    %906 = vmatprep.subr.mxu0 %v490
    %907 = vmatpush1.msra.mxu0 %v489
    %908 = vmatprep.subr.mxu0 %v492
    %909 = vmatpush1.msra.mxu0 %v491
    %910 = vmatprep.subr.mxu0 %v494
    %911 = vmatpush1.msra.mxu0 %v493
    %912 = vmatprep.subr.mxu0 %v496
    %913 = vmatpush1.msra.mxu0 %v495
    %914 = vmatprep.subr.mxu0 %v498
    %915 = vmatpush1.msra.mxu0 %v497
    %916 = vmatprep.subr.mxu0 %v500
    %917 = vmatpush1.msra.mxu0 %v499
    %918 = vmatprep.subr.mxu0 %v502
    %919 = vmatpush1.msra.mxu0 %v501
    %920 = vmatprep.subr.mxu0 %v504
    %921 = vmatpush1.msra.mxu0 %v503
    %922 = vmatprep.subr.mxu0 %v506
    %923 = vmatpush1.msra.mxu0 %v505
    %924 = vmatprep.subr.mxu0 %v508
    %925 = vmatpush1.msra.mxu0 %v507
    %926 = vmatprep.subr.mxu0 %v510
    %927 = vmatpush1.msra.mxu0 %v509
    %928 = vmatprep.subr.mxu0 %v512
    %929 = vmatpush1.msra.mxu0 %v511
    %930 = vmatprep.subr.mxu0 %v514
    %931 = vmatpush1.msra.mxu0 %v513
    %932 = vmatprep.subr.mxu0 %v516
    %933 = vmatpush1.msra.mxu0 %v515
    %934 = vmatprep.subr.mxu0 %v518
    %935 = vmatpush1.msra.mxu0 %v517
    %936 = vmatprep.subr.mxu0 %v520
    %937 = vmatpush1.msra.mxu0 %v519
    %938 = vmatprep.subr.mxu0 %v522
    %939 = vmatpush1.msra.mxu0 %v521
    %940 = vmatprep.subr.mxu0 %v524
    %941 = vmatpush1.msra.mxu0 %v523
    %942 = vmatprep.mubr.f32.mxu0 %v72
    %943 = vmatmul.mubr.f32.gmra.mrb[0].mxu0 %v71
    %v944 = vpop.f32.mrb[0].mxu0
    %v945 = vadd.f32 %v874, %v944
    %v946 = vpop.f32.mrb[0].mxu0
    %v947 = vadd.f32 %v876, %v946
    %948 = vdwg.mxu0
    %949 = vmatprep.subr.mxu0 %v526
    %950 = vmatpush1.msra.mxu0 %v525
    %951 = vmatprep.subr.mxu0 %v528
    %952 = vmatpush1.msra.mxu0 %v527
    %953 = vmatprep.subr.mxu0 %v530
    %954 = vmatpush1.msra.mxu0 %v529
    %955 = vmatprep.subr.mxu0 %v532
    %956 = vmatpush1.msra.mxu0 %v531
    %957 = vmatprep.subr.mxu0 %v534
    %958 = vmatpush1.msra.mxu0 %v533
    %959 = vmatprep.subr.mxu0 %v536
    %960 = vmatpush1.msra.mxu0 %v535
    %961 = vmatprep.subr.mxu0 %v538
    %962 = vmatpush1.msra.mxu0 %v537
    %963 = vmatprep.subr.mxu0 %v540
    %964 = vmatpush1.msra.mxu0 %v539
    %965 = vmatprep.subr.mxu0 %v542
    %966 = vmatpush1.msra.mxu0 %v541
    %967 = vmatprep.subr.mxu0 %v544
    %968 = vmatpush1.msra.mxu0 %v543
    %969 = vmatprep.subr.mxu0 %v546
    %970 = vmatpush1.msra.mxu0 %v545
    %971 = vmatprep.subr.mxu0 %v548
    %972 = vmatpush1.msra.mxu0 %v547
    %973 = vmatprep.subr.mxu0 %v550
    %974 = vmatpush1.msra.mxu0 %v549
    %975 = vmatprep.subr.mxu0 %v552
    %976 = vmatpush1.msra.mxu0 %v551
    %977 = vmatprep.subr.mxu0 %v554
    %978 = vmatpush1.msra.mxu0 %v553
    %979 = vmatprep.subr.mxu0 %v556
    %980 = vmatpush1.msra.mxu0 %v555
    %981 = vmatprep.subr.mxu0 %v558
    %982 = vmatpush1.msra.mxu0 %v557
    %983 = vmatprep.subr.mxu0 %v560
    %984 = vmatpush1.msra.mxu0 %v559
    %985 = vmatprep.subr.mxu0 %v562
    %986 = vmatpush1.msra.mxu0 %v561
    %987 = vmatprep.subr.mxu0 %v564
    %988 = vmatpush1.msra.mxu0 %v563
    %989 = vmatprep.subr.mxu0 %v566
    %990 = vmatpush1.msra.mxu0 %v565
    %991 = vmatprep.subr.mxu0 %v568
    %992 = vmatpush1.msra.mxu0 %v567
    %993 = vmatprep.subr.mxu0 %v570
    %994 = vmatpush1.msra.mxu0 %v569
    %995 = vmatprep.subr.mxu0 %v572
    %996 = vmatpush1.msra.mxu0 %v571
    %997 = vmatprep.subr.mxu0 %v574
    %998 = vmatpush1.msra.mxu0 %v573
    %999 = vmatprep.subr.mxu0 %v576
    %1000 = vmatpush1.msra.mxu0 %v575
    %1001 = vmatprep.subr.mxu0 %v578
    %1002 = vmatpush1.msra.mxu0 %v577
    %1003 = vmatprep.subr.mxu0 %v580
    %1004 = vmatpush1.msra.mxu0 %v579
    %1005 = vmatprep.subr.mxu0 %v582
    %1006 = vmatpush1.msra.mxu0 %v581
    %1007 = vmatprep.subr.mxu0 %v584
    %1008 = vmatpush1.msra.mxu0 %v583
    %1009 = vmatprep.subr.mxu0 %v586
    %1010 = vmatpush1.msra.mxu0 %v585
    %1011 = vmatprep.subr.mxu0 %v588
    %1012 = vmatpush1.msra.mxu0 %v587
    %1013 = vmatprep.mubr.f32.mxu0 %v74
    %1014 = vmatmul.mubr.f32.gmra.mrb[0].mxu0 %v73
    %v1015 = vpop.f32.mrb[0].mxu0
    %v1016 = vadd.f32 %v945, %v1015
    %v1017 = vpop.f32.mrb[0].mxu0
    %v1018 = vadd.f32 %v947, %v1017
    %1019 = vdwg.mxu0
    %1020 = vmatprep.subr.mxu0 %v590
    %1021 = vmatpush1.msra.mxu0 %v589
    %1022 = vmatprep.subr.mxu0 %v592
    %1023 = vmatpush1.msra.mxu0 %v591
    %1024 = vmatprep.subr.mxu0 %v594
    %1025 = vmatpush1.msra.mxu0 %v593
    %1026 = vmatprep.subr.mxu0 %v596
    %1027 = vmatpush1.msra.mxu0 %v595
    %1028 = vmatprep.subr.mxu0 %v598
    %1029 = vmatpush1.msra.mxu0 %v597
    %1030 = vmatprep.subr.mxu0 %v600
    %1031 = vmatpush1.msra.mxu0 %v599
    %1032 = vmatprep.subr.mxu0 %v602
    %1033 = vmatpush1.msra.mxu0 %v601
    %1034 = vmatprep.subr.mxu0 %v604
    %1035 = vmatpush1.msra.mxu0 %v603
    %1036 = vmatprep.subr.mxu0 %v606
    %1037 = vmatpush1.msra.mxu0 %v605
    %1038 = vmatprep.subr.mxu0 %v608
    %1039 = vmatpush1.msra.mxu0 %v607
    %1040 = vmatprep.subr.mxu0 %v610
    %1041 = vmatpush1.msra.mxu0 %v609
    %1042 = vmatprep.subr.mxu0 %v612
    %1043 = vmatpush1.msra.mxu0 %v611
    %1044 = vmatprep.subr.mxu0 %v614
    %1045 = vmatpush1.msra.mxu0 %v613
    %1046 = vmatprep.subr.mxu0 %v616
    %1047 = vmatpush1.msra.mxu0 %v615
    %1048 = vmatprep.subr.mxu0 %v618
    %1049 = vmatpush1.msra.mxu0 %v617
    %1050 = vmatprep.subr.mxu0 %v620
    %1051 = vmatpush1.msra.mxu0 %v619
    %1052 = vmatprep.subr.mxu0 %v622
    %1053 = vmatpush1.msra.mxu0 %v621
    %1054 = vmatprep.subr.mxu0 %v624
    %1055 = vmatpush1.msra.mxu0 %v623
    %1056 = vmatprep.subr.mxu0 %v626
    %1057 = vmatpush1.msra.mxu0 %v625
    %1058 = vmatprep.subr.mxu0 %v628
    %1059 = vmatpush1.msra.mxu0 %v627
    %1060 = vmatprep.subr.mxu0 %v630
    %1061 = vmatpush1.msra.mxu0 %v629
    %1062 = vmatprep.subr.mxu0 %v632
    %1063 = vmatpush1.msra.mxu0 %v631
    %1064 = vmatprep.subr.mxu0 %v634
    %1065 = vmatpush1.msra.mxu0 %v633
    %1066 = vmatprep.subr.mxu0 %v636
    %1067 = vmatpush1.msra.mxu0 %v635
    %1068 = vmatprep.subr.mxu0 %v638
    %1069 = vmatpush1.msra.mxu0 %v637
    %1070 = vmatprep.subr.mxu0 %v640
    %1071 = vmatpush1.msra.mxu0 %v639
    %1072 = vmatprep.subr.mxu0 %v642
    %1073 = vmatpush1.msra.mxu0 %v641
    %1074 = vmatprep.subr.mxu0 %v644
    %1075 = vmatpush1.msra.mxu0 %v643
    %1076 = vmatprep.subr.mxu0 %v646
    %1077 = vmatpush1.msra.mxu0 %v645
    %1078 = vmatprep.subr.mxu0 %v648
    %1079 = vmatpush1.msra.mxu0 %v647
    %1080 = vmatprep.subr.mxu0 %v650
    %1081 = vmatpush1.msra.mxu0 %v649
    %1082 = vmatprep.subr.mxu0 %v652
    %1083 = vmatpush1.msra.mxu0 %v651
    %1084 = vmatprep.mubr.f32.mxu0 %v76
    %1085 = vmatmul.mubr.f32.gmra.mrb[0].mxu0 %v75
    %v1086 = vpop.f32.mrb[0].mxu0
    %v1087 = vadd.f32 %v1016, %v1086
    %v1088 = vpop.f32.mrb[0].mxu0
    %v1089 = vadd.f32 %v1018, %v1088
    %1090 = vdwg.mxu0
    %v1091 = vmax.f32 %v1087, 0.0
    %v1092 = vmax.f32 %v1089, 0.0
    %v1093 = vld [vmem:[%s3] sm:$0xf]
    %v1094 = vld [vmem:[%s3 + $0x4] sm:$0xf]
    %v1095 = vld [vmem:[%s3 + $0x8] sm:$0xf]
    %v1096 = vld [vmem:[%s3 + $0xc] sm:$0xf]
    %v1097 = vld [vmem:[%s3 + $0x10] sm:$0xf]
    %v1098 = vld [vmem:[%s3 + $0x14] sm:$0xf]
    %v1099 = vld [vmem:[%s3 + $0x18] sm:$0xf]
    %v1100 = vld [vmem:[%s3 + $0x1c] sm:$0xf]
    %v1101 = vld [vmem:[%s3 + $0x20] sm:$0xf]
    %v1102 = vld [vmem:[%s3 + $0x24] sm:$0xf]
    %v1103 = vld [vmem:[%s3 + $0x28] sm:$0xf]
    %v1104 = vld [vmem:[%s3 + $0x2c] sm:$0xf]
    %v1105 = vld [vmem:[%s3 + $0x30] sm:$0xf]
    %v1106 = vld [vmem:[%s3 + $0x34] sm:$0xf]
    %v1107 = vld [vmem:[%s3 + $0x38] sm:$0xf]
    %v1108 = vld [vmem:[%s3 + $0x3c] sm:$0xf]
    %v1109 = vld [vmem:[%s3 + $0x40] sm:$0xf]
    %v1110 = vld [vmem:[%s3 + $0x44] sm:$0xf]
    %v1111 = vld [vmem:[%s3 + $0x48] sm:$0xf]
    %v1112 = vld [vmem:[%s3 + $0x4c] sm:$0xf]
    %v1113 = vld [vmem:[%s3 + $0x50] sm:$0xf]
    %v1114 = vld [vmem:[%s3 + $0x54] sm:$0xf]
    %v1115 = vld [vmem:[%s3 + $0x58] sm:$0xf]
    %v1116 = vld [vmem:[%s3 + $0x5c] sm:$0xf]
    %v1117 = vld [vmem:[%s3 + $0x60] sm:$0xf]
    %v1118 = vld [vmem:[%s3 + $0x64] sm:$0xf]
    %v1119 = vld [vmem:[%s3 + $0x68] sm:$0xf]
    %v1120 = vld [vmem:[%s3 + $0x6c] sm:$0xf]
    %v1121 = vld [vmem:[%s3 + $0x70] sm:$0xf]
    %v1122 = vld [vmem:[%s3 + $0x74] sm:$0xf]
    %v1123 = vld [vmem:[%s3 + $0x78] sm:$0xf]
    %v1124 = vld [vmem:[%s3 + $0x7c] sm:$0xf]
    %v1125 = vunpack.c.l.bf16 %v1093
    %v1126 = vunpack.c.l.bf16 %v1094
    %v1127 = vunpack.c.l.bf16 %v1095
    %v1128 = vunpack.c.l.bf16 %v1096
    %v1129 = vunpack.c.l.bf16 %v1097
    %v1130 = vunpack.c.l.bf16 %v1098
    %v1131 = vunpack.c.l.bf16 %v1099
    %v1132 = vunpack.c.l.bf16 %v1100
    %v1133 = vunpack.c.l.bf16 %v1101
    %v1134 = vunpack.c.l.bf16 %v1102
    %v1135 = vunpack.c.l.bf16 %v1103
    %v1136 = vunpack.c.l.bf16 %v1104
    %v1137 = vunpack.c.l.bf16 %v1105
    %v1138 = vunpack.c.l.bf16 %v1106
    %v1139 = vunpack.c.l.bf16 %v1107
    %v1140 = vunpack.c.l.bf16 %v1108
    %v1141 = vunpack.c.l.bf16 %v1109
    %v1142 = vunpack.c.l.bf16 %v1110
    %v1143 = vunpack.c.l.bf16 %v1111
    %v1144 = vunpack.c.l.bf16 %v1112
    %v1145 = vunpack.c.l.bf16 %v1113
    %v1146 = vunpack.c.l.bf16 %v1114
    %v1147 = vunpack.c.l.bf16 %v1115
    %v1148 = vunpack.c.l.bf16 %v1116
    %v1149 = vunpack.c.l.bf16 %v1117
    %v1150 = vunpack.c.l.bf16 %v1118
    %v1151 = vunpack.c.l.bf16 %v1119
    %v1152 = vunpack.c.l.bf16 %v1120
    %v1153 = vunpack.c.l.bf16 %v1121
    %v1154 = vunpack.c.l.bf16 %v1122
    %v1155 = vunpack.c.l.bf16 %v1123
    %v1156 = vunpack.c.l.bf16 %v1124
    %v1157 = vld [vmem:[%s4] sm:$0x1]
    %v1159 = vlaneseq
    %v1160 = vshrl.u32 %v1159, 7
    %v1161 = vsub.s32 0, %v1160
    %v1162 = vrot.slane %v1157, %v1161
    %1164 = vmatprep.subr.mxu0 0.0
    %1165 = vmatpush1.msra.mxu0 %v1125
    %1166 = vmatprep.subr.mxu0 0.0
    %1167 = vmatpush1.msra.mxu0 %v1126
    %1168 = vmatprep.subr.mxu0 0.0
    %1169 = vmatpush1.msra.mxu0 %v1127
    %1170 = vmatprep.subr.mxu0 0.0
    %1171 = vmatpush1.msra.mxu0 %v1128
    %1172 = vmatprep.subr.mxu0 0.0
    %1173 = vmatpush1.msra.mxu0 %v1129
    %1174 = vmatprep.subr.mxu0 0.0
    %1175 = vmatpush1.msra.mxu0 %v1130
    %1176 = vmatprep.subr.mxu0 0.0
    %1177 = vmatpush1.msra.mxu0 %v1131
    %1178 = vmatprep.subr.mxu0 0.0
    %1179 = vmatpush1.msra.mxu0 %v1132
    %1180 = vmatprep.subr.mxu0 0.0
    %1181 = vmatpush1.msra.mxu0 %v1133
    %1182 = vmatprep.subr.mxu0 0.0
    %1183 = vmatpush1.msra.mxu0 %v1134
    %1184 = vmatprep.subr.mxu0 0.0
    %1185 = vmatpush1.msra.mxu0 %v1135
    %1186 = vmatprep.subr.mxu0 0.0
    %1187 = vmatpush1.msra.mxu0 %v1136
    %1188 = vmatprep.subr.mxu0 0.0
    %1189 = vmatpush1.msra.mxu0 %v1137
    %1190 = vmatprep.subr.mxu0 0.0
    %1191 = vmatpush1.msra.mxu0 %v1138
    %1192 = vmatprep.subr.mxu0 0.0
    %1193 = vmatpush1.msra.mxu0 %v1139
    %1194 = vmatprep.subr.mxu0 0.0
    %1195 = vmatpush1.msra.mxu0 %v1140
    %1196 = vmatprep.subr.mxu0 0.0
    %1197 = vmatpush1.msra.mxu0 %v1141
    %1198 = vmatprep.subr.mxu0 0.0
    %1199 = vmatpush1.msra.mxu0 %v1142
    %1200 = vmatprep.subr.mxu0 0.0
    %1201 = vmatpush1.msra.mxu0 %v1143
    %1202 = vmatprep.subr.mxu0 0.0
    %1203 = vmatpush1.msra.mxu0 %v1144
    %1204 = vmatprep.subr.mxu0 0.0
    %1205 = vmatpush1.msra.mxu0 %v1145
    %1206 = vmatprep.subr.mxu0 0.0
    %1207 = vmatpush1.msra.mxu0 %v1146
    %1208 = vmatprep.subr.mxu0 0.0
    %1209 = vmatpush1.msra.mxu0 %v1147
    %1210 = vmatprep.subr.mxu0 0.0
    %1211 = vmatpush1.msra.mxu0 %v1148
    %1212 = vmatprep.subr.mxu0 0.0
    %1213 = vmatpush1.msra.mxu0 %v1149
    %1214 = vmatprep.subr.mxu0 0.0
    %1215 = vmatpush1.msra.mxu0 %v1150
    %1216 = vmatprep.subr.mxu0 0.0
    %1217 = vmatpush1.msra.mxu0 %v1151
    %1218 = vmatprep.subr.mxu0 0.0
    %1219 = vmatpush1.msra.mxu0 %v1152
    %1220 = vmatprep.subr.mxu0 0.0
    %1221 = vmatpush1.msra.mxu0 %v1153
    %1222 = vmatprep.subr.mxu0 0.0
    %1223 = vmatpush1.msra.mxu0 %v1154
    %1224 = vmatprep.subr.mxu0 0.0
    %1225 = vmatpush1.msra.mxu0 %v1155
    %1226 = vmatprep.subr.mxu0 0.0
    %1227 = vmatpush1.msra.mxu0 %v1156
    %1228 = vmatprep.mubr.f32.mxu0 %v1092
    %1229 = vmatmul.mubr.f32.gmra.mrb[0].mxu0 %v1091
    %v1230 = vpop.f32.mrb[0].mxu0
    %v1231 = vadd.f32 %v1162, %v1230
    %v1232 = vpop.f32.mrb[0].mxu0
    %1233 = vdwg.mxu0
    %v1234 = vmax.f32 %v1231, 0.0
    %v1235 = vld [vmem:[%s5] sm:$0xf]
    %v1236 = vld [vmem:[%s5 + $0x4] sm:$0xf]
    %v1237 = vld [vmem:[%s5 + $0x8] sm:$0xf]
    %v1238 = vld [vmem:[%s5 + $0xc] sm:$0xf]
    %v1239 = vld [vmem:[%s5 + $0x10] sm:$0xf]
    %v1240 = vld [vmem:[%s5 + $0x14] sm:$0xf]
    %v1241 = vld [vmem:[%s5 + $0x18] sm:$0xf]
    %v1242 = vld [vmem:[%s5 + $0x1c] sm:$0xf]
    %v1243 = vld [vmem:[%s5 + $0x20] sm:$0xf]
    %v1244 = vld [vmem:[%s5 + $0x24] sm:$0xf]
    %v1245 = vld [vmem:[%s5 + $0x28] sm:$0xf]
    %v1246 = vld [vmem:[%s5 + $0x2c] sm:$0xf]
    %v1247 = vld [vmem:[%s5 + $0x30] sm:$0xf]
    %v1248 = vld [vmem:[%s5 + $0x34] sm:$0xf]
    %v1249 = vld [vmem:[%s5 + $0x38] sm:$0xf]
    %v1250 = vld [vmem:[%s5 + $0x3c] sm:$0xf]
    %v1251 = vunpack.c.l.bf16 %v1235
    %v1252 = vunpack.c.l.bf16 %v1236
    %v1253 = vunpack.c.l.bf16 %v1237
    %v1254 = vunpack.c.l.bf16 %v1238
    %v1255 = vunpack.c.l.bf16 %v1239
    %v1256 = vunpack.c.l.bf16 %v1240
    %v1257 = vunpack.c.l.bf16 %v1241
    %v1258 = vunpack.c.l.bf16 %v1242
    %v1259 = vunpack.c.l.bf16 %v1243
    %v1260 = vunpack.c.l.bf16 %v1244
    %v1261 = vunpack.c.l.bf16 %v1245
    %v1262 = vunpack.c.l.bf16 %v1246
    %v1263 = vunpack.c.l.bf16 %v1247
    %v1264 = vunpack.c.l.bf16 %v1248
    %v1265 = vunpack.c.l.bf16 %v1249
    %v1266 = vunpack.c.l.bf16 %v1250
    %v1267 = vld [vmem:[%s6] sm:$0x1]
    %v1269 = vlaneseq
    %v1270 = vshrl.u32 %v1269, 7
    %v1271 = vsub.s32 0, %v1270
    %v1272 = vrot.slane %v1267, %v1271
    %1274 = vmatprep.subr.mxu0 0.0
    %1275 = vmatpush1.msra.mxu0 %v1251
    %1276 = vmatprep.subr.mxu0 0.0
    %1277 = vmatpush1.msra.mxu0 %v1252
    %1278 = vmatprep.subr.mxu0 0.0
    %1279 = vmatpush1.msra.mxu0 %v1253
    %1280 = vmatprep.subr.mxu0 0.0
    %1281 = vmatpush1.msra.mxu0 %v1254
    %1282 = vmatprep.subr.mxu0 0.0
    %1283 = vmatpush1.msra.mxu0 %v1255
    %1284 = vmatprep.subr.mxu0 0.0
    %1285 = vmatpush1.msra.mxu0 %v1256
    %1286 = vmatprep.subr.mxu0 0.0
    %1287 = vmatpush1.msra.mxu0 %v1257
    %1288 = vmatprep.subr.mxu0 0.0
    %1289 = vmatpush1.msra.mxu0 %v1258
    %1290 = vmatprep.subr.mxu0 0.0
    %1291 = vmatpush1.msra.mxu0 %v1259
    %1292 = vmatprep.subr.mxu0 0.0
    %1293 = vmatpush1.msra.mxu0 %v1260
    %1294 = vmatprep.subr.mxu0 0.0
    %1295 = vmatpush1.msra.mxu0 %v1261
    %1296 = vmatprep.subr.mxu0 0.0
    %1297 = vmatpush1.msra.mxu0 %v1262
    %1298 = vmatprep.subr.mxu0 0.0
    %1299 = vmatpush1.msra.mxu0 %v1263
    %1300 = vmatprep.subr.mxu0 0.0
    %1301 = vmatpush1.msra.mxu0 %v1264
    %1302 = vmatprep.subr.mxu0 0.0
    %1303 = vmatpush1.msra.mxu0 %v1265
    %1304 = vmatprep.subr.mxu0 0.0
    %1305 = vmatpush1.msra.mxu0 %v1266
    %1306 = vmatprep.subr.mxu0 0.0
    %1307 = vmatpush1.msra.mxu0 0.0
    %1308 = vmatprep.subr.mxu0 0.0
    %1309 = vmatpush1.msra.mxu0 0.0
    %1310 = vmatprep.subr.mxu0 0.0
    %1311 = vmatpush1.msra.mxu0 0.0
    %1312 = vmatprep.subr.mxu0 0.0
    %1313 = vmatpush1.msra.mxu0 0.0
    %1314 = vmatprep.subr.mxu0 0.0
    %1315 = vmatpush1.msra.mxu0 0.0
    %1316 = vmatprep.subr.mxu0 0.0
    %1317 = vmatpush1.msra.mxu0 0.0
    %1318 = vmatprep.subr.mxu0 0.0
    %1319 = vmatpush1.msra.mxu0 0.0
    %1320 = vmatprep.subr.mxu0 0.0
    %1321 = vmatpush1.msra.mxu0 0.0
    %1322 = vmatprep.subr.mxu0 0.0
    %1323 = vmatpush1.msra.mxu0 0.0
    %1324 = vmatprep.subr.mxu0 0.0
    %1325 = vmatpush1.msra.mxu0 0.0
    %1326 = vmatprep.subr.mxu0 0.0
    %1327 = vmatpush1.msra.mxu0 0.0
    %1328 = vmatprep.subr.mxu0 0.0
    %1329 = vmatpush1.msra.mxu0 0.0
    %1330 = vmatprep.subr.mxu0 0.0
    %1331 = vmatpush1.msra.mxu0 0.0
    %1332 = vmatprep.subr.mxu0 0.0
    %1333 = vmatpush1.msra.mxu0 0.0
    %1334 = vmatprep.subr.mxu0 0.0
    %1335 = vmatpush1.msra.mxu0 0.0
    %1336 = vmatprep.subr.mxu0 0.0
    %1337 = vmatpush1.msra.mxu0 0.0
    %1338 = vmatprep.mubr.f32.mxu0 0.0
    %1339 = vmatmul.mubr.f32.gmra.mrb[0].mxu0 %v1234
    %v1340 = vpop.f32.mrb[0].mxu0
    %v1341 = vadd.f32 %v1272, %v1340
    %v1342 = vpop.f32.mrb[0].mxu0
    %1343 = vdwg.mxu0
    %v1344 = vmax.f32 %v1341, 0.0
    %v1345 = vld [vmem:[%s7] sm:$0xf]
    %v1346 = vld [vmem:[%s7 + $0x4] sm:$0xf]
    %v1347 = vld [vmem:[%s7 + $0x8] sm:$0xf]
    %v1348 = vld [vmem:[%s7 + $0xc] sm:$0xf]
    %v1349 = vld [vmem:[%s7 + $0x10] sm:$0xf]
    %v1350 = vld [vmem:[%s7 + $0x14] sm:$0xf]
    %v1351 = vld [vmem:[%s7 + $0x18] sm:$0xf]
    %v1352 = vld [vmem:[%s7 + $0x1c] sm:$0xf]
    %v1353 = vunpack.c.l.bf16 %v1345
    %v1354 = vunpack.c.l.bf16 %v1346
    %v1355 = vunpack.c.l.bf16 %v1347
    %v1356 = vunpack.c.l.bf16 %v1348
    %v1357 = vunpack.c.l.bf16 %v1349
    %v1358 = vunpack.c.l.bf16 %v1350
    %v1359 = vunpack.c.l.bf16 %v1351
    %v1360 = vunpack.c.l.bf16 %v1352
    %v1361 = vld [vmem:[%s8] sm:$0x1]
    %v1363 = vlaneseq
    %v1364 = vshrl.u32 %v1363, 7
    %v1365 = vsub.s32 0, %v1364
    %v1366 = vrot.slane %v1361, %v1365
    %vm1368 = vcmask 523264
    %v1370 = vsel %vm1368, %v1344, 0
    %1372 = vmatprep.subr.mxu0 0.0
    %1373 = vmatpush1.msra.mxu0 %v1353
    %1374 = vmatprep.subr.mxu0 0.0
    %1375 = vmatpush1.msra.mxu0 %v1354
    %1376 = vmatprep.subr.mxu0 0.0
    %1377 = vmatpush1.msra.mxu0 %v1355
    %1378 = vmatprep.subr.mxu0 0.0
    %1379 = vmatpush1.msra.mxu0 %v1356
    %1380 = vmatprep.subr.mxu0 0.0
    %1381 = vmatpush1.msra.mxu0 %v1357
    %1382 = vmatprep.subr.mxu0 0.0
    %1383 = vmatpush1.msra.mxu0 %v1358
    %1384 = vmatprep.subr.mxu0 0.0
    %1385 = vmatpush1.msra.mxu0 %v1359
    %1386 = vmatprep.subr.mxu0 0.0
    %1387 = vmatpush1.msra.mxu0 %v1360
    %1388 = vmatprep.subr.mxu0 0.0
    %1389 = vmatpush1.msra.mxu0 0.0
    %1390 = vmatprep.subr.mxu0 0.0
    %1391 = vmatpush1.msra.mxu0 0.0
    %1392 = vmatprep.subr.mxu0 0.0
    %1393 = vmatpush1.msra.mxu0 0.0
    %1394 = vmatprep.subr.mxu0 0.0
    %1395 = vmatpush1.msra.mxu0 0.0
    %1396 = vmatprep.subr.mxu0 0.0
    %1397 = vmatpush1.msra.mxu0 0.0
    %1398 = vmatprep.subr.mxu0 0.0
    %1399 = vmatpush1.msra.mxu0 0.0
    %1400 = vmatprep.subr.mxu0 0.0
    %1401 = vmatpush1.msra.mxu0 0.0
    %1402 = vmatprep.subr.mxu0 0.0
    %1403 = vmatpush1.msra.mxu0 0.0
    %1404 = vmatprep.subr.mxu0 0.0
    %1405 = vmatpush1.msra.mxu0 0.0
    %1406 = vmatprep.subr.mxu0 0.0
    %1407 = vmatpush1.msra.mxu0 0.0
    %1408 = vmatprep.subr.mxu0 0.0
    %1409 = vmatpush1.msra.mxu0 0.0
    %1410 = vmatprep.subr.mxu0 0.0
    %1411 = vmatpush1.msra.mxu0 0.0
    %1412 = vmatprep.subr.mxu0 0.0
    %1413 = vmatpush1.msra.mxu0 0.0
    %1414 = vmatprep.subr.mxu0 0.0
    %1415 = vmatpush1.msra.mxu0 0.0
    %1416 = vmatprep.subr.mxu0 0.0
    %1417 = vmatpush1.msra.mxu0 0.0
    %1418 = vmatprep.subr.mxu0 0.0
    %1419 = vmatpush1.msra.mxu0 0.0
    %1420 = vmatprep.subr.mxu0 0.0
    %1421 = vmatpush1.msra.mxu0 0.0
    %1422 = vmatprep.subr.mxu0 0.0
    %1423 = vmatpush1.msra.mxu0 0.0
    %1424 = vmatprep.subr.mxu0 0.0
    %1425 = vmatpush1.msra.mxu0 0.0
    %1426 = vmatprep.subr.mxu0 0.0
    %1427 = vmatpush1.msra.mxu0 0.0
    %1428 = vmatprep.subr.mxu0 0.0
    %1429 = vmatpush1.msra.mxu0 0.0
    %1430 = vmatprep.subr.mxu0 0.0
    %1431 = vmatpush1.msra.mxu0 0.0
    %1432 = vmatprep.subr.mxu0 0.0
    %1433 = vmatpush1.msra.mxu0 0.0
    %1434 = vmatprep.subr.mxu0 0.0
    %1435 = vmatpush1.msra.mxu0 0.0
    %1436 = vmatprep.mubr.f32.mxu0 0.0
    %1437 = vmatmul.mubr.f32.gmra.mrb[0].mxu0 %v1370
    %v1438 = vpop.f32.mrb[0].mxu0
    %v1439 = vadd.f32 %v1366, %v1438
    %v1440 = vpop.f32.mrb[0].mxu0
    %1441 = vdwg.mxu0
    %v1442 = vmax.f32 %v1439, 0.0
    %v1443 = vld [vmem:[%s9] sm:$0xf]
    %v1444 = vld [vmem:[%s9 + $0x4] sm:$0xf]
    %v1445 = vunpack.c.l.bf16 %v1443
    %v1446 = vunpack.c.l.bf16 %v1444
    %v1447 = vld [vmem:[%s10] sm:$0x1]
    %v1449 = vlaneseq
    %v1450 = vshrl.u32 %v1449, 7
    %v1451 = vsub.s32 0, %v1450
    %v1452 = vrot.slane %v1447, %v1451
    %vm1454 = vcmask 130048
    %v1456 = vsel %vm1454, %v1442, 0
    %1458 = vmatprep.subr.mxu0 0.0
    %1459 = vmatpush1.msra.mxu0 %v1445
    %1460 = vmatprep.subr.mxu0 0.0
    %1461 = vmatpush1.msra.mxu0 %v1446
    %1462 = vmatprep.subr.mxu0 0.0
    %1463 = vmatpush1.msra.mxu0 0.0
    %1464 = vmatprep.subr.mxu0 0.0
    %1465 = vmatpush1.msra.mxu0 0.0
    %1466 = vmatprep.subr.mxu0 0.0
    %1467 = vmatpush1.msra.mxu0 0.0
    %1468 = vmatprep.subr.mxu0 0.0
    %1469 = vmatpush1.msra.mxu0 0.0
    %1470 = vmatprep.subr.mxu0 0.0
    %1471 = vmatpush1.msra.mxu0 0.0
    %1472 = vmatprep.subr.mxu0 0.0
    %1473 = vmatpush1.msra.mxu0 0.0
    %1474 = vmatprep.subr.mxu0 0.0
    %1475 = vmatpush1.msra.mxu0 0.0
    %1476 = vmatprep.subr.mxu0 0.0
    %1477 = vmatpush1.msra.mxu0 0.0
    %1478 = vmatprep.subr.mxu0 0.0
    %1479 = vmatpush1.msra.mxu0 0.0
    %1480 = vmatprep.subr.mxu0 0.0
    %1481 = vmatpush1.msra.mxu0 0.0
    %1482 = vmatprep.subr.mxu0 0.0
    %1483 = vmatpush1.msra.mxu0 0.0
    %1484 = vmatprep.subr.mxu0 0.0
    %1485 = vmatpush1.msra.mxu0 0.0
    %1486 = vmatprep.subr.mxu0 0.0
    %1487 = vmatpush1.msra.mxu0 0.0
    %1488 = vmatprep.subr.mxu0 0.0
    %1489 = vmatpush1.msra.mxu0 0.0
    %1490 = vmatprep.subr.mxu0 0.0
    %1491 = vmatpush1.msra.mxu0 0.0
    %1492 = vmatprep.subr.mxu0 0.0
    %1493 = vmatpush1.msra.mxu0 0.0
    %1494 = vmatprep.subr.mxu0 0.0
    %1495 = vmatpush1.msra.mxu0 0.0
    %1496 = vmatprep.subr.mxu0 0.0
    %1497 = vmatpush1.msra.mxu0 0.0
    %1498 = vmatprep.subr.mxu0 0.0
    %1499 = vmatpush1.msra.mxu0 0.0
    %1500 = vmatprep.subr.mxu0 0.0
    %1501 = vmatpush1.msra.mxu0 0.0
    %1502 = vmatprep.subr.mxu0 0.0
    %1503 = vmatpush1.msra.mxu0 0.0
    %1504 = vmatprep.subr.mxu0 0.0
    %1505 = vmatpush1.msra.mxu0 0.0
    %1506 = vmatprep.subr.mxu0 0.0
    %1507 = vmatpush1.msra.mxu0 0.0
    %1508 = vmatprep.subr.mxu0 0.0
    %1509 = vmatpush1.msra.mxu0 0.0
    %1510 = vmatprep.subr.mxu0 0.0
    %1511 = vmatpush1.msra.mxu0 0.0
    %1512 = vmatprep.subr.mxu0 0.0
    %1513 = vmatpush1.msra.mxu0 0.0
    %1514 = vmatprep.subr.mxu0 0.0
    %1515 = vmatpush1.msra.mxu0 0.0
    %1516 = vmatprep.subr.mxu0 0.0
    %1517 = vmatpush1.msra.mxu0 0.0
    %1518 = vmatprep.subr.mxu0 0.0
    %1519 = vmatpush1.msra.mxu0 0.0
    %1520 = vmatprep.subr.mxu0 0.0
    %1521 = vmatpush1.msra.mxu0 0.0
    %1522 = vmatprep.mubr.f32.mxu0 0.0
    %1523 = vmatmul.mubr.f32.gmra.mrb[0].mxu0 %v1456
    %v1524 = vpop.f32.mrb[0].mxu0
    %v1525 = vadd.f32 %v1452, %v1524
    %v1526 = vpop.f32.mrb[0].mxu0
    %1527 = vdwg.mxu0
    %1528 = vst [vmem:[#allocation7] sm:$0xff] %v1525
    // Predicated region
    $region54: #{tpu_custom_call.1} parent=1 // pred_check
      _
    $region55: #{tpu_custom_call.1} parent=1 // pred_check_branch
      %1530 = sbr.rel (0) target = $region57
    $region56: #{tpu_custom_call.1} parent=1 // pred_region
      %s1532 = ssub.s32 128, 128
      %1533 = vsyncadd [#allocation4], %s1532
      %s1535 = sshll.u32 [#allocation7], 4
      %s1536 = int_to_ptr.vmem [resolvable:$true] %s1535
      %1538 = dma.vmem_to_hbm [thread:$0]  %s1536, 128, %s11, [#allocation4]
    $region57: #{tpu_custom_call.1} parent=1 // pred_fallthru
      _
    // Predicated region
    $region58: #{tpu_custom_call.1} parent=1 // pred_check
      _
    $region59: #{tpu_custom_call.1} parent=1 // pred_check_branch
      %1540 = sbr.rel (0) target = $region61
    $region60: #{tpu_custom_call.1} parent=1 // pred_region
      %1541 = dma.done [#allocation4], 128
    $region61: #{tpu_custom_call.1} parent=1 // pred_fallthru
      _
    %1542 = vsyncpa [#allocation3], 1
    %1543 = vsyncpa [#allocation6], 1
    %1544 = vsyncpa [#allocation4], 1

</llo_original>
